<compile_context>
chip_gen: v7x
topology: tpu7x:2x2x1
jax: 0.10.0
libtpu: 0.0.40
codegen_flags: <defaults>
</compile_context>

<pallas_src>
import math

import jax
import jax.numpy as jnp
from jax import lax
from jax.experimental import pallas as pl
from jax.experimental.pallas import tpu as pltpu


def make_kernel(num_heads: int, head_dim: int, seq_len: int):
    H, hd, S = num_heads, head_dim, seq_len

    def kernel(x_ref, convw_ref, wqkv_ref, wout_ref, o_ref):
        R, D = x_ref.shape          # R = bb * S
        bb = R // S

        # ---- hoisted weight loads / broadcasts (once per grid step) ----
        w = convw_ref[...]                                   # (3, D) f32
        w0 = jnp.broadcast_to(w[0:1, :], (R, D))
        w1 = jnp.broadcast_to(w[1:2, :], (R, D))
        w2 = jnp.broadcast_to(w[2:3, :], (R, D))
        wqkv = wqkv_ref[...]                                 # (D, 3D) bf16 (Wpe folded, q scaled)
        wout = wout_ref[...]                                 # (D, D)  bf16

        # Per-sequence boundary masks for the whole (bb*S, D) block.
        row = lax.broadcasted_iota(jnp.int32, (R, D), 0)
        first = row == 0
        last = row == (S - 1)
        for bi in range(1, bb):
            first = jnp.logical_or(first, row == bi * S)
            last = jnp.logical_or(last, row == (bi + 1) * S - 1)
        fzero = jnp.zeros((R, D), jnp.float32)

        x = x_ref[...]                                       # (R, D) f32

        # ---- depthwise 3-tap conv along seq, all sequences at once ----
        x_up = jnp.where(first, fzero, pltpu.roll(x, 1, axis=0))       # x[s-1]
        x_dn = jnp.where(last, fzero, pltpu.roll(x, R - 1, axis=0))    # x[s+1]
        conv = x_up * w0 + x * w1 + x_dn * w2                # (R, D) f32

        dn_proj = (((0,), (1,)), ((), ()))

        # ---- stage 1: fused qkv projection + per-head scores ----
        qkv_bf = []
        score_blocks = []
        for bi in range(bb):
            h_bf = conv[bi * S:(bi + 1) * S, :].astype(jnp.bfloat16)   # (S, D)
            # qkvT[j, s] = sum_i wqkv[i, j] * h[s, i]  -> heads on sublanes
            qkvT = lax.dot_general(wqkv, h_bf, dn_proj,
                                   preferred_element_type=jnp.float32)  # (3D, S) f32
            qkvT = qkvT.astype(jnp.bfloat16)                 # single cast per batch elem
            qkv_bf.append(qkvT)
            for hh in range(H):
                qh = qkvT[hh * hd:(hh + 1) * hd, :]          # (hd, S)
                kh = qkvT[D + hh * hd:D + (hh + 1) * hd, :]
                # scores[q, k] = sum_d qh[d, q] * kh[d, k]  (1/sqrt(hd) pre-folded)
                score_blocks.append(
                    lax.dot_general(qh, kh, (((0,), (0,)), ((), ())),
                                    preferred_element_type=jnp.float32))   # (S, S) f32

        # ---- stage 2: one batched softmax over all bb*H heads ----
        scores = (jnp.concatenate(score_blocks, axis=0)
                  if len(score_blocks) > 1 else score_blocks[0])           # (bb*H*S, S)
        m = jnp.max(scores, axis=-1, keepdims=True)
        e = jnp.exp(scores - m)
        denom = jnp.sum(e, axis=-1, keepdims=True)
        p = (e * pl.reciprocal(denom, approx=True)).astype(jnp.bfloat16)   # (bb*H*S, S)

        # ---- stage 3: PV + output projection ----
        outs = []
        for bi in range(bb):
            qkvT = qkv_bf[bi]
            head_outs = []
            for hh in range(H):
                vh = qkvT[2 * D + hh * hd:2 * D + (hh + 1) * hd, :]        # (hd, S)
                ph = p[(bi * H + hh) * S:(bi * H + hh + 1) * S, :]         # (S, S)
                # ohT[d, q] = sum_k vh[d, k] * p[q, k]
                head_outs.append(
                    lax.dot_general(vh, ph, (((1,), (1,)), ((), ())),
                                    preferred_element_type=jnp.float32))   # (hd, S)
            attnT = jnp.concatenate(head_outs, axis=0).astype(jnp.bfloat16)  # (D, S)
            # out[s, j] = sum_d attnT[d, s] * WoutT[d, j]
            outs.append(lax.dot_general(attnT, wout, (((0,), (0,)), ((), ())),
                                        preferred_element_type=jnp.float32))  # (S, D)

        o_ref[...] = jnp.concatenate(outs, axis=0) if bb > 1 else outs[0]

    return kernel


def my_module_forward(x, conv_w, w_pe, w_qkv, w_out, num_heads, *, batch_block=None):
    """x: (B, S, D) f32. conv_w: (D, 1, 3, 3). Linear weights in PyTorch
    convention (out_features, in_features).

    batch_block: batch elements per grid step. Default: auto — 1 on v7x
    (two TensorCores, grid=(B,) parallel), B on single-TC v5e/v6e (grid=(1,)).
    """
    B, S, D = x.shape
    head_dim = D // num_heads
    assert head_dim * num_heads == D

    if batch_block is None:
        try:
            kind = jax.devices()[0].device_kind.lower()
        except Exception:
            kind = ""
        two_cores = ("v7" in kind) or ("7x" in kind)
        batch_block = 1 if (two_cores and B > 1) else B
    bb = batch_block
    assert B % bb == 0

    # Only the middle width-column of the 3x3 depthwise kernel contributes.
    convw = jnp.transpose(conv_w[:, 0, :, 1])                          # (3, D) f32

    # Fold (I + Wpe^T) and the 1/sqrt(head_dim) q-scale into one (D, 3D) weight.
    inv_scale = 1.0 / math.sqrt(head_dim)
    m_pe = jnp.eye(D, dtype=jnp.float32) + jnp.transpose(w_pe)         # (D, D)
    wqkv_t = m_pe @ jnp.transpose(w_qkv)                               # (D, 3D) f32
    scale_vec = jnp.concatenate([jnp.full((D,), inv_scale, jnp.float32),
                                 jnp.ones((2 * D,), jnp.float32)])
    wqkv_t = (wqkv_t * scale_vec[None, :]).astype(jnp.bfloat16)        # (D, 3D) bf16
    wout_t = jnp.transpose(w_out).astype(jnp.bfloat16)                 # (D, D) bf16

    x2 = x.reshape(B * S, D)
    kernel = make_kernel(num_heads, head_dim, S)

    out2 = pl.pallas_call(
        kernel,
        out_shape=jax.ShapeDtypeStruct((B * S, D), jnp.float32),
        grid=(B // bb,),
        in_specs=[
            pl.BlockSpec((bb * S, D), lambda b: (b, 0)),     # x block
            pl.BlockSpec((3, D), lambda b: (0, 0)),          # conv taps
            pl.BlockSpec((D, 3 * D), lambda b: (0, 0)),      # fused qkv weight
            pl.BlockSpec((D, D), lambda b: (0, 0)),          # out_proj^T
        ],
        out_specs=pl.BlockSpec((bb * S, D), lambda b: (b, 0)),
        compiler_params=pltpu.CompilerParams(
            dimension_semantics=("parallel",)),
    )(x2, convw, wqkv_t, wout_t)
    return out2.reshape(B, S, D)


def reference_forward(x, conv_w, w_pe, w_qkv, w_out, num_heads):
    """Pure-JAX reference mirroring the PyTorch module semantics."""
    B, S, D = x.shape
    hd = D // num_heads
    w = conv_w[:, 0, :, 1]                                   # (D, 3)
    xp = jnp.pad(x, ((0, 0), (1, 1), (0, 0)))
    conv = (xp[:, :-2, :] * w[:, 0] + xp[:, 1:-1, :] * w[:, 1]
            + xp[:, 2:, :] * w[:, 2])
    h = conv + conv @ w_pe.T
    qkv = h @ w_qkv.T
    q, k, v = (qkv[..., :D].astype(jnp.bfloat16),
               qkv[..., D:2 * D].astype(jnp.bfloat16),
               qkv[..., 2 * D:].astype(jnp.bfloat16))
    q = q.reshape(B, S, num_heads, hd).transpose(0, 2, 1, 3)
    k = k.reshape(B, S, num_heads, hd).transpose(0, 2, 1, 3)
    v = v.reshape(B, S, num_heads, hd).transpose(0, 2, 1, 3)
    scale = jnp.sqrt(jnp.asarray(hd, dtype=jnp.bfloat16))
    s = jnp.einsum("bhqd,bhkd->bhqk", q, k,
                   preferred_element_type=jnp.float32).astype(jnp.bfloat16) / scale
    p = jax.nn.softmax(s.astype(jnp.float32), axis=-1).astype(jnp.bfloat16)
    o = jnp.einsum("bhqk,bhkd->bhqd", p, v,
                   preferred_element_type=jnp.float32).astype(jnp.bfloat16)
    o = o.transpose(0, 2, 1, 3).reshape(B, S, D).astype(jnp.float32)
    return o @ w_out.T


if __name__ == "__main__":
    B, S, D, H = 2, 8, 32, 4

    key = jax.random.PRNGKey(0)
    kx, kc, kp, kq, ko = jax.random.split(key, 5)
    x = jax.random.normal(kx, (B, S, D), dtype=jnp.float32)
    conv_w = 0.2 * jax.random.normal(kc, (D, 1, 3, 3), dtype=jnp.float32)
    w_pe = 0.1 * jax.random.normal(kp, (D, D), dtype=jnp.float32)
    w_qkv = 0.1 * jax.random.normal(kq, (3 * D, D), dtype=jnp.float32)
    w_out = 0.1 * jax.random.normal(ko, (D, D), dtype=jnp.float32)

    out = my_module_forward(x, conv_w, w_pe, w_qkv, w_out, H)
    out = jax.block_until_ready(out)

    ref = reference_forward(x, conv_w, w_pe, w_qkv, w_out, H)
    assert out.shape == (B, S, D) and out.dtype == jnp.float32
    assert jnp.allclose(out, ref, rtol=2e-2, atol=2e-2), "mismatch vs reference"

    print("KERNEL_OK")
</pallas_src>

<mosaic_0001>
module attributes {stable_mosaic.version = 11 : i64} {
  func.func @kernel(%arg0: i32, %arg1: memref<16x32xf32, #tpu.memory_space<vmem>>, %arg2: memref<3x32xf32, #tpu.memory_space<vmem>>, %arg3: memref<32x96xbf16, #tpu.memory_space<vmem>>, %arg4: memref<32x32xbf16, #tpu.memory_space<vmem>>, %arg5: memref<16x32xf32, #tpu.memory_space<vmem>>) attributes {dimension_semantics = [#tpu.dimension_semantics<parallel>], iteration_bounds = array<i64: 1>, scalar_prefetch = 0 : i64, scratch_operands = 0 : i64, tpu.core_type = #tpu.core_type<tc>, window_params = [{transform_indices = @transform_0, window_bounds = array<i64: 16, 32>}, {pipeline_mode = #tpu.pipeline_mode<synchronous>, transform_indices = @transform_1, window_bounds = array<i64: 3, 32>}, {pipeline_mode = #tpu.pipeline_mode<synchronous>, transform_indices = @transform_2, window_bounds = array<i64: 32, 96>}, {pipeline_mode = #tpu.pipeline_mode<synchronous>, transform_indices = @transform_3, window_bounds = array<i64: 32, 32>}, {transform_indices = @transform_4, window_bounds = array<i64: 16, 32>}]} {
    %c0 = arith.constant 0 : index
    %c0_0 = arith.constant 0 : index
    %0 = vector.load %arg2[%c0, %c0_0] : memref<3x32xf32, #tpu.memory_space<vmem>>, vector<3x32xf32>
    %1 = vector.extract_strided_slice %0 {offsets = [0, 0], sizes = [1, 32], strides = [1, 1]} : vector<3x32xf32> to vector<1x32xf32>
    %2 = vector.shape_cast %1 : vector<1x32xf32> to vector<1x32xf32>
    %3 = vector.broadcast %2 : vector<1x32xf32> to vector<16x32xf32>
    %4 = vector.extract_strided_slice %0 {offsets = [1, 0], sizes = [1, 32], strides = [1, 1]} : vector<3x32xf32> to vector<1x32xf32>
    %5 = vector.shape_cast %4 : vector<1x32xf32> to vector<1x32xf32>
    %6 = vector.broadcast %5 : vector<1x32xf32> to vector<16x32xf32>
    %7 = vector.extract_strided_slice %0 {offsets = [2, 0], sizes = [1, 32], strides = [1, 1]} : vector<3x32xf32> to vector<1x32xf32>
    %8 = vector.shape_cast %7 : vector<1x32xf32> to vector<1x32xf32>
    %9 = vector.broadcast %8 : vector<1x32xf32> to vector<16x32xf32>
    %c0_1 = arith.constant 0 : index
    %c0_2 = arith.constant 0 : index
    %10 = vector.load %arg3[%c0_1, %c0_2] : memref<32x96xbf16, #tpu.memory_space<vmem>>, vector<32x96xbf16>
    %c0_3 = arith.constant 0 : index
    %c0_4 = arith.constant 0 : index
    %11 = vector.load %arg4[%c0_3, %c0_4] : memref<32x32xbf16, #tpu.memory_space<vmem>>, vector<32x32xbf16>
    %12 = tpu.iota {dimensions = array<i32: 0>} : vector<16x32xi32>
    %c0_i32 = arith.constant 0 : i32
    %13 = vector.broadcast %c0_i32 : i32 to vector<16x32xi32>
    %14 = arith.cmpi eq, %12, %13 : vector<16x32xi32>
    %c7_i32 = arith.constant 7 : i32
    %15 = vector.broadcast %c7_i32 : i32 to vector<16x32xi32>
    %16 = arith.cmpi eq, %12, %15 : vector<16x32xi32>
    %c8_i32 = arith.constant 8 : i32
    %17 = vector.broadcast %c8_i32 : i32 to vector<16x32xi32>
    %18 = arith.cmpi eq, %12, %17 : vector<16x32xi32>
    %19 = arith.ori %14, %18 : vector<16x32xi1>
    %c15_i32 = arith.constant 15 : i32
    %20 = vector.broadcast %c15_i32 : i32 to vector<16x32xi32>
    %21 = arith.cmpi eq, %12, %20 : vector<16x32xi32>
    %22 = arith.ori %16, %21 : vector<16x32xi1>
    %cst = arith.constant 0.000000e+00 : f32
    %23 = vector.broadcast %cst : f32 to vector<16x32xf32>
    %c0_5 = arith.constant 0 : index
    %c0_6 = arith.constant 0 : index
    %24 = vector.load %arg1[%c0_5, %c0_6] : memref<16x32xf32, #tpu.memory_space<vmem>>, vector<16x32xf32>
    %c1_i32 = arith.constant 1 : i32
    %25 = tpu.dynamic_rotate %24 by %c1_i32 dim 0 : vector<16x32xf32>, i32 -> vector<16x32xf32>
    %26 = arith.select %19, %23, %25 : vector<16x32xi1>, vector<16x32xf32>
    %c15_i32_7 = arith.constant 15 : i32
    %27 = tpu.dynamic_rotate %24 by %c15_i32_7 dim 0 : vector<16x32xf32>, i32 -> vector<16x32xf32>
    %28 = arith.select %22, %23, %27 : vector<16x32xi1>, vector<16x32xf32>
    %29 = arith.mulf %26, %3 : vector<16x32xf32>
    %30 = arith.mulf %24, %6 : vector<16x32xf32>
    %31 = arith.addf %29, %30 : vector<16x32xf32>
    %32 = arith.mulf %28, %9 : vector<16x32xf32>
    %33 = arith.addf %31, %32 : vector<16x32xf32>
    %34 = vector.extract_strided_slice %33 {offsets = [0, 0], sizes = [8, 32], strides = [1, 1]} : vector<16x32xf32> to vector<8x32xf32>
    %35 = arith.truncf %34 : vector<8x32xf32> to vector<8x32xbf16>
    %cst_8 = arith.constant dense<0.000000e+00> : vector<96x8xf32>
    %36 = tpu.matmul %10, %35, %cst_8 {dimension_numbers = #tpu.dot_dimension_numbers<[0], [1], [1], [0], [0, 1, 1, 0], [], []>} : vector<32x96xbf16>, vector<8x32xbf16>, vector<96x8xf32> -> vector<96x8xf32>
    %37 = arith.truncf %36 : vector<96x8xf32> to vector<96x8xbf16>
    %38 = vector.extract_strided_slice %37 {offsets = [0, 0], sizes = [8, 8], strides = [1, 1]} : vector<96x8xbf16> to vector<8x8xbf16>
    %39 = vector.extract_strided_slice %37 {offsets = [32, 0], sizes = [8, 8], strides = [1, 1]} : vector<96x8xbf16> to vector<8x8xbf16>
    %cst_9 = arith.constant dense<0.000000e+00> : vector<8x8xf32>
    %40 = tpu.matmul %38, %39, %cst_9 {dimension_numbers = #tpu.dot_dimension_numbers<[0], [0], [1], [1], [0, 1, 1, 1], [], []>} : vector<8x8xbf16>, vector<8x8xbf16>, vector<8x8xf32> -> vector<8x8xf32>
    %41 = vector.extract_strided_slice %37 {offsets = [8, 0], sizes = [8, 8], strides = [1, 1]} : vector<96x8xbf16> to vector<8x8xbf16>
    %42 = vector.extract_strided_slice %37 {offsets = [40, 0], sizes = [8, 8], strides = [1, 1]} : vector<96x8xbf16> to vector<8x8xbf16>
    %cst_10 = arith.constant dense<0.000000e+00> : vector<8x8xf32>
    %43 = tpu.matmul %41, %42, %cst_10 {dimension_numbers = #tpu.dot_dimension_numbers<[0], [0], [1], [1], [0, 1, 1, 1], [], []>} : vector<8x8xbf16>, vector<8x8xbf16>, vector<8x8xf32> -> vector<8x8xf32>
    %44 = vector.extract_strided_slice %37 {offsets = [16, 0], sizes = [8, 8], strides = [1, 1]} : vector<96x8xbf16> to vector<8x8xbf16>
    %45 = vector.extract_strided_slice %37 {offsets = [48, 0], sizes = [8, 8], strides = [1, 1]} : vector<96x8xbf16> to vector<8x8xbf16>
    %cst_11 = arith.constant dense<0.000000e+00> : vector<8x8xf32>
    %46 = tpu.matmul %44, %45, %cst_11 {dimension_numbers = #tpu.dot_dimension_numbers<[0], [0], [1], [1], [0, 1, 1, 1], [], []>} : vector<8x8xbf16>, vector<8x8xbf16>, vector<8x8xf32> -> vector<8x8xf32>
    %47 = vector.extract_strided_slice %37 {offsets = [24, 0], sizes = [8, 8], strides = [1, 1]} : vector<96x8xbf16> to vector<8x8xbf16>
    %48 = vector.extract_strided_slice %37 {offsets = [56, 0], sizes = [8, 8], strides = [1, 1]} : vector<96x8xbf16> to vector<8x8xbf16>
    %cst_12 = arith.constant dense<0.000000e+00> : vector<8x8xf32>
    %49 = tpu.matmul %47, %48, %cst_12 {dimension_numbers = #tpu.dot_dimension_numbers<[0], [0], [1], [1], [0, 1, 1, 1], [], []>} : vector<8x8xbf16>, vector<8x8xbf16>, vector<8x8xf32> -> vector<8x8xf32>
    %50 = vector.extract_strided_slice %33 {offsets = [8, 0], sizes = [8, 32], strides = [1, 1]} : vector<16x32xf32> to vector<8x32xf32>
    %51 = arith.truncf %50 : vector<8x32xf32> to vector<8x32xbf16>
    %cst_13 = arith.constant dense<0.000000e+00> : vector<96x8xf32>
    %52 = tpu.matmul %10, %51, %cst_13 {dimension_numbers = #tpu.dot_dimension_numbers<[0], [1], [1], [0], [0, 1, 1, 0], [], []>} : vector<32x96xbf16>, vector<8x32xbf16>, vector<96x8xf32> -> vector<96x8xf32>
    %53 = arith.truncf %52 : vector<96x8xf32> to vector<96x8xbf16>
    %54 = vector.extract_strided_slice %53 {offsets = [0, 0], sizes = [8, 8], strides = [1, 1]} : vector<96x8xbf16> to vector<8x8xbf16>
    %55 = vector.extract_strided_slice %53 {offsets = [32, 0], sizes = [8, 8], strides = [1, 1]} : vector<96x8xbf16> to vector<8x8xbf16>
    %cst_14 = arith.constant dense<0.000000e+00> : vector<8x8xf32>
    %56 = tpu.matmul %54, %55, %cst_14 {dimension_numbers = #tpu.dot_dimension_numbers<[0], [0], [1], [1], [0, 1, 1, 1], [], []>} : vector<8x8xbf16>, vector<8x8xbf16>, vector<8x8xf32> -> vector<8x8xf32>
    %57 = vector.extract_strided_slice %53 {offsets = [8, 0], sizes = [8, 8], strides = [1, 1]} : vector<96x8xbf16> to vector<8x8xbf16>
    %58 = vector.extract_strided_slice %53 {offsets = [40, 0], sizes = [8, 8], strides = [1, 1]} : vector<96x8xbf16> to vector<8x8xbf16>
    %cst_15 = arith.constant dense<0.000000e+00> : vector<8x8xf32>
    %59 = tpu.matmul %57, %58, %cst_15 {dimension_numbers = #tpu.dot_dimension_numbers<[0], [0], [1], [1], [0, 1, 1, 1], [], []>} : vector<8x8xbf16>, vector<8x8xbf16>, vector<8x8xf32> -> vector<8x8xf32>
    %60 = vector.extract_strided_slice %53 {offsets = [16, 0], sizes = [8, 8], strides = [1, 1]} : vector<96x8xbf16> to vector<8x8xbf16>
    %61 = vector.extract_strided_slice %53 {offsets = [48, 0], sizes = [8, 8], strides = [1, 1]} : vector<96x8xbf16> to vector<8x8xbf16>
    %cst_16 = arith.constant dense<0.000000e+00> : vector<8x8xf32>
    %62 = tpu.matmul %60, %61, %cst_16 {dimension_numbers = #tpu.dot_dimension_numbers<[0], [0], [1], [1], [0, 1, 1, 1], [], []>} : vector<8x8xbf16>, vector<8x8xbf16>, vector<8x8xf32> -> vector<8x8xf32>
    %63 = vector.extract_strided_slice %53 {offsets = [24, 0], sizes = [8, 8], strides = [1, 1]} : vector<96x8xbf16> to vector<8x8xbf16>
    %64 = vector.extract_strided_slice %53 {offsets = [56, 0], sizes = [8, 8], strides = [1, 1]} : vector<96x8xbf16> to vector<8x8xbf16>
    %cst_17 = arith.constant dense<0.000000e+00> : vector<8x8xf32>
    %65 = tpu.matmul %63, %64, %cst_17 {dimension_numbers = #tpu.dot_dimension_numbers<[0], [0], [1], [1], [0, 1, 1, 1], [], []>} : vector<8x8xbf16>, vector<8x8xbf16>, vector<8x8xf32> -> vector<8x8xf32>
    %66 = tpu.concatenate %40, %43, %46, %49, %56, %59, %62, %65 in 0 : vector<8x8xf32>, vector<8x8xf32>, vector<8x8xf32>, vector<8x8xf32>, vector<8x8xf32>, vector<8x8xf32>, vector<8x8xf32>, vector<8x8xf32> -> vector<64x8xf32>
    %cst_18 = arith.constant dense<0xFF800000> : vector<64xf32>
    %67 = vector.multi_reduction <maximumf>, %66, %cst_18 [1] : vector<64x8xf32> to vector<64xf32>
    %68 = vector.shape_cast %67 : vector<64xf32> to vector<64x1xf32>
    %69 = vector.broadcast %68 : vector<64x1xf32> to vector<64x8xf32>
    %70 = arith.subf %66, %69 : vector<64x8xf32>
    %71 = math.exp %70 : vector<64x8xf32>
    %cst_19 = arith.constant dense<0.000000e+00> : vector<64xf32>
    %72 = vector.multi_reduction <add>, %71, %cst_19 [1] : vector<64x8xf32> to vector<64xf32>
    %73 = vector.shape_cast %72 : vector<64xf32> to vector<64x1xf32>
    %74 = tpu.reciprocal %73 {approx = true} : vector<64x1xf32> -> vector<64x1xf32>
    %75 = vector.broadcast %74 : vector<64x1xf32> to vector<64x8xf32>
    %76 = arith.mulf %71, %75 : vector<64x8xf32>
    %77 = arith.truncf %76 : vector<64x8xf32> to vector<64x8xbf16>
    %78 = vector.extract_strided_slice %37 {offsets = [64, 0], sizes = [8, 8], strides = [1, 1]} : vector<96x8xbf16> to vector<8x8xbf16>
    %79 = vector.extract_strided_slice %77 {offsets = [0, 0], sizes = [8, 8], strides = [1, 1]} : vector<64x8xbf16> to vector<8x8xbf16>
    %cst_20 = arith.constant dense<0.000000e+00> : vector<8x8xf32>
    %80 = tpu.matmul %78, %79, %cst_20 {dimension_numbers = #tpu.dot_dimension_numbers<[1], [1], [0], [0], [0, 0, 1, 0], [], []>} : vector<8x8xbf16>, vector<8x8xbf16>, vector<8x8xf32> -> vector<8x8xf32>
    %81 = vector.extract_strided_slice %37 {offsets = [72, 0], sizes = [8, 8], strides = [1, 1]} : vector<96x8xbf16> to vector<8x8xbf16>
    %82 = vector.extract_strided_slice %77 {offsets = [8, 0], sizes = [8, 8], strides = [1, 1]} : vector<64x8xbf16> to vector<8x8xbf16>
    %cst_21 = arith.constant dense<0.000000e+00> : vector<8x8xf32>
    %83 = tpu.matmul %81, %82, %cst_21 {dimension_numbers = #tpu.dot_dimension_numbers<[1], [1], [0], [0], [0, 0, 1, 0], [], []>} : vector<8x8xbf16>, vector<8x8xbf16>, vector<8x8xf32> -> vector<8x8xf32>
    %84 = vector.extract_strided_slice %37 {offsets = [80, 0], sizes = [8, 8], strides = [1, 1]} : vector<96x8xbf16> to vector<8x8xbf16>
    %85 = vector.extract_strided_slice %77 {offsets = [16, 0], sizes = [8, 8], strides = [1, 1]} : vector<64x8xbf16> to vector<8x8xbf16>
    %cst_22 = arith.constant dense<0.000000e+00> : vector<8x8xf32>
    %86 = tpu.matmul %84, %85, %cst_22 {dimension_numbers = #tpu.dot_dimension_numbers<[1], [1], [0], [0], [0, 0, 1, 0], [], []>} : vector<8x8xbf16>, vector<8x8xbf16>, vector<8x8xf32> -> vector<8x8xf32>
    %87 = vector.extract_strided_slice %37 {offsets = [88, 0], sizes = [8, 8], strides = [1, 1]} : vector<96x8xbf16> to vector<8x8xbf16>
    %88 = vector.extract_strided_slice %77 {offsets = [24, 0], sizes = [8, 8], strides = [1, 1]} : vector<64x8xbf16> to vector<8x8xbf16>
    %cst_23 = arith.constant dense<0.000000e+00> : vector<8x8xf32>
    %89 = tpu.matmul %87, %88, %cst_23 {dimension_numbers = #tpu.dot_dimension_numbers<[1], [1], [0], [0], [0, 0, 1, 0], [], []>} : vector<8x8xbf16>, vector<8x8xbf16>, vector<8x8xf32> -> vector<8x8xf32>
    %90 = tpu.concatenate %80, %83, %86, %89 in 0 : vector<8x8xf32>, vector<8x8xf32>, vector<8x8xf32>, vector<8x8xf32> -> vector<32x8xf32>
    %91 = arith.truncf %90 : vector<32x8xf32> to vector<32x8xbf16>
    %cst_24 = arith.constant dense<0.000000e+00> : vector<8x32xf32>
    %92 = tpu.matmul %91, %11, %cst_24 {dimension_numbers = #tpu.dot_dimension_numbers<[0], [0], [1], [1], [0, 1, 1, 1], [], []>} : vector<32x8xbf16>, vector<32x32xbf16>, vector<8x32xf32> -> vector<8x32xf32>
    %93 = vector.extract_strided_slice %53 {offsets = [64, 0], sizes = [8, 8], strides = [1, 1]} : vector<96x8xbf16> to vector<8x8xbf16>
    %94 = vector.extract_strided_slice %77 {offsets = [32, 0], sizes = [8, 8], strides = [1, 1]} : vector<64x8xbf16> to vector<8x8xbf16>
    %cst_25 = arith.constant dense<0.000000e+00> : vector<8x8xf32>
    %95 = tpu.matmul %93, %94, %cst_25 {dimension_numbers = #tpu.dot_dimension_numbers<[1], [1], [0], [0], [0, 0, 1, 0], [], []>} : vector<8x8xbf16>, vector<8x8xbf16>, vector<8x8xf32> -> vector<8x8xf32>
    %96 = vector.extract_strided_slice %53 {offsets = [72, 0], sizes = [8, 8], strides = [1, 1]} : vector<96x8xbf16> to vector<8x8xbf16>
    %97 = vector.extract_strided_slice %77 {offsets = [40, 0], sizes = [8, 8], strides = [1, 1]} : vector<64x8xbf16> to vector<8x8xbf16>
    %cst_26 = arith.constant dense<0.000000e+00> : vector<8x8xf32>
    %98 = tpu.matmul %96, %97, %cst_26 {dimension_numbers = #tpu.dot_dimension_numbers<[1], [1], [0], [0], [0, 0, 1, 0], [], []>} : vector<8x8xbf16>, vector<8x8xbf16>, vector<8x8xf32> -> vector<8x8xf32>
    %99 = vector.extract_strided_slice %53 {offsets = [80, 0], sizes = [8, 8], strides = [1, 1]} : vector<96x8xbf16> to vector<8x8xbf16>
    %100 = vector.extract_strided_slice %77 {offsets = [48, 0], sizes = [8, 8], strides = [1, 1]} : vector<64x8xbf16> to vector<8x8xbf16>
    %cst_27 = arith.constant dense<0.000000e+00> : vector<8x8xf32>
    %101 = tpu.matmul %99, %100, %cst_27 {dimension_numbers = #tpu.dot_dimension_numbers<[1], [1], [0], [0], [0, 0, 1, 0], [], []>} : vector<8x8xbf16>, vector<8x8xbf16>, vector<8x8xf32> -> vector<8x8xf32>
    %102 = vector.extract_strided_slice %53 {offsets = [88, 0], sizes = [8, 8], strides = [1, 1]} : vector<96x8xbf16> to vector<8x8xbf16>
    %103 = vector.extract_strided_slice %77 {offsets = [56, 0], sizes = [8, 8], strides = [1, 1]} : vector<64x8xbf16> to vector<8x8xbf16>
    %cst_28 = arith.constant dense<0.000000e+00> : vector<8x8xf32>
    %104 = tpu.matmul %102, %103, %cst_28 {dimension_numbers = #tpu.dot_dimension_numbers<[1], [1], [0], [0], [0, 0, 1, 0], [], []>} : vector<8x8xbf16>, vector<8x8xbf16>, vector<8x8xf32> -> vector<8x8xf32>
    %105 = tpu.concatenate %95, %98, %101, %104 in 0 : vector<8x8xf32>, vector<8x8xf32>, vector<8x8xf32>, vector<8x8xf32> -> vector<32x8xf32>
    %106 = arith.truncf %105 : vector<32x8xf32> to vector<32x8xbf16>
    %cst_29 = arith.constant dense<0.000000e+00> : vector<8x32xf32>
    %107 = tpu.matmul %106, %11, %cst_29 {dimension_numbers = #tpu.dot_dimension_numbers<[0], [0], [1], [1], [0, 1, 1, 1], [], []>} : vector<32x8xbf16>, vector<32x32xbf16>, vector<8x32xf32> -> vector<8x32xf32>
    %108 = tpu.concatenate %92, %107 in 0 : vector<8x32xf32>, vector<8x32xf32> -> vector<16x32xf32>
    %c0_30 = arith.constant 0 : index
    %c0_31 = arith.constant 0 : index
    %109 = vector.load %arg5[%c0_30, %c0_31] : memref<16x32xf32, #tpu.memory_space<vmem>>, vector<16x32xf32>
    tpu.vector_store %arg5[%c0_30, %c0_31], %108 {strides = array<i32>} : memref<16x32xf32, #tpu.memory_space<vmem>>, vector<16x32xf32>,
    return
  }
  func.func @transform_0(%arg0: i32) -> (i32, i32) {
    %c0_i32 = arith.constant 0 : i32
    %c0_i32_0 = arith.constant 0 : i32
    return %arg0, %c0_i32 : i32, i32
  }
  func.func @transform_1(%arg0: i32) -> (i32, i32) {
    %c0_i32 = arith.constant 0 : i32
    %c0_i32_0 = arith.constant 0 : i32
    %c0_i32_1 = arith.constant 0 : i32
    return %c0_i32, %c0_i32_0 : i32, i32
  }
  func.func @transform_2(%arg0: i32) -> (i32, i32) {
    %c0_i32 = arith.constant 0 : i32
    %c0_i32_0 = arith.constant 0 : i32
    %c0_i32_1 = arith.constant 0 : i32
    return %c0_i32, %c0_i32_0 : i32, i32
  }
  func.func @transform_3(%arg0: i32) -> (i32, i32) {
    %c0_i32 = arith.constant 0 : i32
    %c0_i32_0 = arith.constant 0 : i32
    %c0_i32_1 = arith.constant 0 : i32
    return %c0_i32, %c0_i32_0 : i32, i32
  }
  func.func @transform_4(%arg0: i32) -> (i32, i32) {
    %c0_i32 = arith.constant 0 : i32
    %c0_i32_0 = arith.constant 0 : i32
    return %arg0, %c0_i32 : i32, i32
  }
}

</mosaic_0001>

<llo_original>
// kernel: tpu_custom_call.1
$region0: #{tpu_custom_call.1}
  #allocation0 [shape = 'u32[]', space=smem, size = 0x4, offset = 0x4, fixed_abs, tag = 'smem constant byte address 0x4 - core index']
  #allocation1 [shape = 'u32[144,128]{1,0:T(1,128)}', space=vmem, size = 0x12000, scoped, tag = 'internal scratch']
  %s0 = inlined_call_operand.hbm [shape: f32[16,32], index: 0, kind: input, shape index: {}]
  %s1 = inlined_call_operand.hbm [shape: f32[3,32], index: 1, kind: input, shape index: {}]
  %s2 = inlined_call_operand.hbm [shape: bf16[32,96], index: 2, kind: input, shape index: {}]
  %s3 = inlined_call_operand.hbm [shape: bf16[32,32], index: 3, kind: input, shape index: {}]
  %s4 = inlined_call_operand.hbm [shape: f32[16,32], index: 4, kind: output, shape index: {}]
  %s5 = sld [smem:[#allocation0]]
  $region42: #{tpu_custom_call.1} parent=0
    _
  %s7 = ssub.s32 1, %s5
  %s8 = scalar_select 0, %s7, %s5
  $region1: #{tpu_custom_call.1} parent=0
    #allocation2 [shape = 'u8[8192]{0}', space=vmem, size = 0x2000, scoped, tag = 'input window, operand 0, single buffered']
    #allocation3 [shape = 's32[1]{0}', space=sflag, size = 0x4, scoped, tag = 'scoped memory for tpu_custom_call.1']
    #allocation4 [shape = 's32[1]{0}', space=sflag, size = 0x4, scoped, tag = 'scoped memory for tpu_custom_call.1']
    #allocation5 [shape = 'u8[2048]{0}', space=vmem, size = 0x800, scoped, tag = 'input window, operand 1, single buffered']
    #allocation6 [shape = 's32[1]{0}', space=sflag, size = 0x4, scoped, tag = 'scoped memory for tpu_custom_call.1']
    #allocation7 [shape = 'u8[8192]{0}', space=vmem, size = 0x2000, scoped, tag = 'input window, operand 2, single buffered']
    #allocation8 [shape = 'u8[8192]{0}', space=vmem, size = 0x2000, scoped, tag = 'input window, operand 3, single buffered']
    #allocation9 [shape = 's32[1]{0}', space=sflag, size = 0x4, scoped, tag = 'scoped memory for tpu_custom_call.1']
    #allocation10 [shape = 'u8[8192]{0}', space=vmem, size = 0x2000, scoped, tag = 'output window, operand 0, single buffered']
    %9 = vsyncpa [#allocation3], 0
    %10 = vsyncpa [#allocation6], 0
    %11 = vsyncpa [#allocation9], 0
    %12 = vsyncpa [#allocation4], 0
    // Predicated region
    $region2: #{tpu_custom_call.1} parent=1 // pred_check
      _
    $region3: #{tpu_custom_call.1} parent=1 // pred_check_branch
      %14 = sbr.rel (0) target = $region5
    $region4: #{tpu_custom_call.1} parent=1 // pred_region
      %s16 = ssub.s32 256, 256
      %17 = vsyncadd [#allocation3], %s16
      %s18 = sshll.u32 [#allocation2], 4
      %s19 = int_to_ptr.vmem [resolvable:$true] %s18
      %24 = dma.hbm_to_vmem [thread:$0]  %s0, 256, %s19, [#allocation3], 128, 128, 8
    $region5: #{tpu_custom_call.1} parent=1 // pred_fallthru
      _
    // Predicated region
    $region6: #{tpu_custom_call.1} parent=1 // pred_check
      _
    $region7: #{tpu_custom_call.1} parent=1 // pred_check_branch
      %26 = sbr.rel (0) target = $region9
    $region8: #{tpu_custom_call.1} parent=1 // pred_region
      %s28 = ssub.s32 64, 64
      %29 = vsyncadd [#allocation6], %s28
      %s31 = sshll.u32 [#allocation5], 4
      %s32 = int_to_ptr.vmem [resolvable:$true] %s31
      %34 = dma.hbm_to_vmem [thread:$0]  %s1, 64, %s32, [#allocation6]
    $region9: #{tpu_custom_call.1} parent=1 // pred_fallthru
      _
    // Predicated region
    $region10: #{tpu_custom_call.1} parent=1 // pred_check
      _
    $region11: #{tpu_custom_call.1} parent=1 // pred_check_branch
      %36 = sbr.rel (0) target = $region13
    $region12: #{tpu_custom_call.1} parent=1 // pred_region
      %s38 = ssub.s32 256, 256
      %39 = vsyncadd [#allocation6], %s38
      %s40 = sshll.u32 [#allocation7], 4
      %s41 = int_to_ptr.vmem [resolvable:$true] %s40
      %46 = dma.hbm_to_vmem [thread:$0]  %s2, 256, %s41, [#allocation6], 64, 64, 4
    $region13: #{tpu_custom_call.1} parent=1 // pred_fallthru
      _
    // Predicated region
    $region14: #{tpu_custom_call.1} parent=1 // pred_check
      _
    $region15: #{tpu_custom_call.1} parent=1 // pred_check_branch
      %48 = sbr.rel (0) target = $region17
    $region16: #{tpu_custom_call.1} parent=1 // pred_region
      %s50 = ssub.s32 256, 256
      %51 = vsyncadd [#allocation9], %s50
      %s52 = sshll.u32 [#allocation8], 4
      %s53 = int_to_ptr.vmem [resolvable:$true] %s52
      %58 = dma.hbm_to_vmem [thread:$0]  %s3, 256, %s53, [#allocation9], 64, 64, 4
    $region17: #{tpu_custom_call.1} parent=1 // pred_fallthru
      _
    // Predicated region
    $region18: #{tpu_custom_call.1} parent=1 // pred_check
      _
    $region19: #{tpu_custom_call.1} parent=1 // pred_check_branch
      %60 = sbr.rel (0) target = $region21
    $region20: #{tpu_custom_call.1} parent=1 // pred_region
      %61 = dma.done [#allocation3], 256
    $region21: #{tpu_custom_call.1} parent=1 // pred_fallthru
      _
    // Predicated region
    $region22: #{tpu_custom_call.1} parent=1 // pred_check
      _
    $region23: #{tpu_custom_call.1} parent=1 // pred_check_branch
      %63 = sbr.rel (0) target = $region25
    $region24: #{tpu_custom_call.1} parent=1 // pred_region
      %64 = dma.done [#allocation6], 64
    $region25: #{tpu_custom_call.1} parent=1 // pred_fallthru
      _
    // Predicated region
    $region26: #{tpu_custom_call.1} parent=1 // pred_check
      _
    $region27: #{tpu_custom_call.1} parent=1 // pred_check_branch
      %66 = sbr.rel (0) target = $region29
    $region28: #{tpu_custom_call.1} parent=1 // pred_region
      %67 = dma.done [#allocation6], 256
    $region29: #{tpu_custom_call.1} parent=1 // pred_fallthru
      _
    // Predicated region
    $region30: #{tpu_custom_call.1} parent=1 // pred_check
      _
    $region31: #{tpu_custom_call.1} parent=1 // pred_check_branch
      %69 = sbr.rel (0) target = $region33
    $region32: #{tpu_custom_call.1} parent=1 // pred_region
      %70 = dma.done [#allocation9], 256
    $region33: #{tpu_custom_call.1} parent=1 // pred_fallthru
      _
    %v72 = vld [vmem:[#allocation5] sm:$0x7]
    %v73 = vlaneseq
    %v74 = vshrl.u32 %v73, 7
    %v75 = vsub.s32 0, %v74
    %v76 = vrot.slane %v72, %v75
    %v77 = vlaneseq
    %v78 = vshrl.u32 %v77, 7
    %v79 = vsub.s32 1, %v78
    %v80 = vrot.slane %v72, %v79
    %v81 = vlaneseq
    %v82 = vshrl.u32 %v81, 7
    %v83 = vsub.s32 2, %v82
    %v84 = vrot.slane %v72, %v83
    %v85 = vld [vmem:[#allocation7] sm:$0xf]
    %v86 = vld [vmem:[#allocation7 + $0x4] sm:$0xf]
    %v87 = vld [vmem:[#allocation7 + $0x8] sm:$0xf]
    %v88 = vld [vmem:[#allocation7 + $0xc] sm:$0xf]
    %v89 = vld [vmem:[#allocation8] sm:$0xf]
    %v90 = vld [vmem:[#allocation8 + $0x4] sm:$0xf]
    %v91 = vld [vmem:[#allocation8 + $0x8] sm:$0xf]
    %v92 = vld [vmem:[#allocation8 + $0xc] sm:$0xf]
    %v93 = vlaneseq
    %v94 = vshrl.u32 %v93, 7
    %v95 = vadd.s32 %v94, 8
    %vm96 = vcmp.eq.s32.totalorder %v94, 0
    %vm97 = vcmp.eq.s32.totalorder %v95, 0
    %vm98 = vcmp.eq.s32.totalorder %v94, 7
    %vm99 = vcmp.eq.s32.totalorder %v95, 7
    %vm100 = vcmp.eq.s32.totalorder %v94, 8
    %vm101 = vcmp.eq.s32.totalorder %v95, 8
    %vm102 = vmor %vm96, %vm100
    %vm103 = vmor %vm97, %vm101
    %vm104 = vcmp.eq.s32.totalorder %v94, 15
    %vm105 = vcmp.eq.s32.totalorder %v95, 15
    %vm106 = vmor %vm98, %vm104
    %vm107 = vmor %vm99, %vm105
    %v108 = vld [vmem:[#allocation2] sm:$0xff]
    %v109 = vld [vmem:[#allocation2 + $0x8] sm:$0xff]
    %v110 = vrot.slane %v108, 7
    %v111 = vrot.slane %v109, 7
    %vm112 = vcmp.lt.s32.totalorder %v94, 1
    %v113 = vsel %vm112, %v110, %v111
    %v114 = vsel %vm112, %v111, %v110
    %v115 = vsel %vm102, 0.0, %v114
    %v116 = vsel %vm103, 0.0, %v113
    %v117 = vrot.slane %v108, 1
    %v118 = vrot.slane %v109, 1
    %vm119 = vcmp.lt.s32.totalorder %v94, 7
    %v120 = vsel %vm119, %v117, %v118
    %v121 = vsel %vm119, %v118, %v117
    %v122 = vsel %vm106, 0.0, %v120
    %v123 = vsel %vm107, 0.0, %v121
    %v124 = vmul.f32 %v115, %v76
    %v125 = vmul.f32 %v116, %v76
    %v126 = vmul.f32 %v108, %v80
    %v127 = vmul.f32 %v109, %v80
    %v128 = vadd.f32 %v124, %v126
    %v129 = vadd.f32 %v125, %v127
    %v130 = vmul.f32 %v122, %v84
    %v131 = vmul.f32 %v123, %v84
    %v132 = vadd.f32 %v128, %v130
    %v133 = vadd.f32 %v129, %v131
    %v134 = vpack.c.bf16 %v132, %v132
    %v139 = vunpack.c.l.b16 %v85
    %v140 = vunpack.c.l.b16 %v86
    %v141 = vunpack.c.l.b16 %v87
    %v142 = vunpack.c.l.b16 %v88
    %v143 = vpack.c.b16 %v140, %v139
    %v144 = vpack.c.b16 %v142, %v141
    %147 = vxpose.xlu0.c.b16.start [1/8] %v143, 128
    %148 = vxpose.xlu0.c.b16.cont [2/8] %v144, 128
    %149 = vxpose.xlu0.c.b16.cont [3/8] 0, 128
    %150 = vxpose.xlu0.c.b16.cont [4/8] 0, 128
    %151 = vxpose.xlu0.c.b16.cont [5/8] 0, 128
    %152 = vxpose.xlu0.c.b16.cont [6/8] 0, 128
    %153 = vxpose.xlu0.c.b16.cont [7/8] 0, 128
    %154 = vxpose.xlu0.c.b16.end [8/8] 0, 128
    %v155 = vpop.trf.xlu0
    %v156 = vpop.trf.xlu0
    %v157 = vpop.trf.xlu0
    %v158 = vpop.trf.xlu0
    %v159 = vpop.trf.xlu0
    %v160 = vpop.trf.xlu0
    %v161 = vpop.trf.xlu0
    %v162 = vpop.trf.xlu0
    %vm163 = vcmask 261120
    %v165 = vsel %vm163, %v155, 0
    %v168 = vsel %vm163, %v156, 0
    %v171 = vsel %vm163, %v157, 0
    %v174 = vsel %vm163, %v158, 0
    %v177 = vsel %vm163, %v159, 0
    %v180 = vsel %vm163, %v160, 0
    %v183 = vsel %vm163, %v134, 0
    %185 = vmatprep.subr.bf16.mxu0 0
    %186 = vmatpush1.bf16.xpose.msra.mxu0 %v183
    %187 = vmatprep.subr.bf16.mxu0 0
    %188 = vmatpush1.bf16.xpose.msra.mxu0 0
    %189 = vmatprep.subr.bf16.mxu0 0
    %190 = vmatpush1.bf16.xpose.msra.mxu0 0
    %191 = vmatprep.subr.bf16.mxu0 0
    %192 = vmatpush1.bf16.xpose.msra.mxu0 0
    %193 = vmatprep.subr.bf16.mxu0 0
    %194 = vmatpush1.bf16.xpose.msra.mxu0 0
    %195 = vmatprep.subr.bf16.mxu0 0
    %196 = vmatpush1.bf16.xpose.msra.mxu0 0
    %197 = vmatprep.subr.bf16.mxu0 0
    %198 = vmatpush1.bf16.xpose.msra.mxu0 0
    %199 = vmatprep.subr.bf16.mxu0 0
    %200 = vmatpush1.bf16.xpose.msra.mxu0 0
    %201 = vmatprep.subr.bf16.mxu0 0
    %202 = vmatpush1.bf16.xpose.msra.mxu0 0
    %203 = vmatprep.subr.bf16.mxu0 0
    %204 = vmatpush1.bf16.xpose.msra.mxu0 0
    %205 = vmatprep.subr.bf16.mxu0 0
    %206 = vmatpush1.bf16.xpose.msra.mxu0 0
    %207 = vmatprep.subr.bf16.mxu0 0
    %208 = vmatpush1.bf16.xpose.msra.mxu0 0
    %209 = vmatprep.subr.bf16.mxu0 0
    %210 = vmatpush1.bf16.xpose.msra.mxu0 0
    %211 = vmatprep.subr.bf16.mxu0 0
    %212 = vmatpush1.bf16.xpose.msra.mxu0 0
    %213 = vmatprep.subr.bf16.mxu0 0
    %214 = vmatpush1.bf16.xpose.msra.mxu0 0
    %215 = vmatprep.subr.bf16.mxu0 0
    %216 = vmatpush1.bf16.xpose.msra.mxu0 0
    %217 = vmatprep.mubr.bf16.mxu0 0
    %218 = vmatmul.mubr.bf16.gmra.mrb[0].mxu0 %v165
    %v219 = vpop.f32.mrb[0].mxu0
    %v220 = vadd.f32 0.0, %v219
    %v221 = vpop.f32.mrb[0].mxu0
    %v222 = vpop.f32.mrb[0].mxu0
    %v223 = vadd.f32 0.0, %v222
    %v224 = vpop.f32.mrb[0].mxu0
    %225 = vmatprep.mubr.bf16.mxu0 0
    %226 = vmatmul.mubr.bf16.gmra.mrb[0].mxu0 %v168
    %v227 = vpop.f32.mrb[0].mxu0
    %v228 = vadd.f32 0.0, %v227
    %v229 = vpop.f32.mrb[0].mxu0
    %v230 = vpop.f32.mrb[0].mxu0
    %v231 = vadd.f32 0.0, %v230
    %v232 = vpop.f32.mrb[0].mxu0
    %233 = vmatprep.mubr.bf16.mxu0 0
    %234 = vmatmul.mubr.bf16.gmra.mrb[0].mxu0 %v171
    %v235 = vpop.f32.mrb[0].mxu0
    %v236 = vadd.f32 0.0, %v235
    %v237 = vpop.f32.mrb[0].mxu0
    %v238 = vpop.f32.mrb[0].mxu0
    %v239 = vadd.f32 0.0, %v238
    %v240 = vpop.f32.mrb[0].mxu0
    %241 = vmatprep.mubr.bf16.mxu0 0
    %242 = vmatmul.mubr.bf16.gmra.mrb[0].mxu0 %v174
    %v243 = vpop.f32.mrb[0].mxu0
    %v244 = vadd.f32 0.0, %v243
    %v245 = vpop.f32.mrb[0].mxu0
    %v246 = vpop.f32.mrb[0].mxu0
    %v247 = vadd.f32 0.0, %v246
    %v248 = vpop.f32.mrb[0].mxu0
    %249 = vmatprep.mubr.bf16.mxu0 0
    %250 = vmatmul.mubr.bf16.gmra.mrb[0].mxu0 %v177
    %v251 = vpop.f32.mrb[0].mxu0
    %v252 = vadd.f32 0.0, %v251
    %v253 = vpop.f32.mrb[0].mxu0
    %v254 = vpop.f32.mrb[0].mxu0
    %v255 = vadd.f32 0.0, %v254
    %v256 = vpop.f32.mrb[0].mxu0
    %257 = vmatprep.mubr.bf16.mxu0 0
    %258 = vmatmul.mubr.bf16.gmra.mrb[0].mxu0 %v180
    %v259 = vpop.f32.mrb[0].mxu0
    %v260 = vadd.f32 0.0, %v259
    %v261 = vpop.f32.mrb[0].mxu0
    %v262 = vpop.f32.mrb[0].mxu0
    %v263 = vadd.f32 0.0, %v262
    %v264 = vpop.f32.mrb[0].mxu0
    %265 = vdwg.mxu0
    %v266 = vpack.c.bf16 %v223, %v220
    %v267 = vpack.c.bf16 %v231, %v228
    %v268 = vpack.c.bf16 %v239, %v236
    %v269 = vpack.c.bf16 %v247, %v244
    %v270 = vpack.c.bf16 %v255, %v252
    %v271 = vpack.c.bf16 %v263, %v260
    %272 = vxpose.xlu0.c.b16.start [1/8] %v266, 128
    %273 = vxpose.xlu0.c.b16.cont [2/8] 0, 128
    %274 = vxpose.xlu0.c.b16.cont [3/8] 0, 128
    %275 = vxpose.xlu0.c.b16.cont [4/8] 0, 128
    %276 = vxpose.xlu0.c.b16.cont [5/8] 0, 128
    %277 = vxpose.xlu0.c.b16.cont [6/8] 0, 128
    %278 = vxpose.xlu0.c.b16.cont [7/8] 0, 128
    %279 = vxpose.xlu0.c.b16.end [8/8] 0, 128
    %v280 = vpop.trf.xlu0
    %v281 = vpop.trf.xlu0
    %v282 = vpop.trf.xlu0
    %v283 = vpop.trf.xlu0
    %v284 = vpop.trf.xlu0
    %v285 = vpop.trf.xlu0
    %v286 = vpop.trf.xlu0
    %v287 = vpop.trf.xlu0
    %vm288 = vcmask 64512
    %v290 = vsel %vm288, %v280, 0
    %vm292 = vcmask 1043456
    %v294 = vsel %vm292, %v268, 0
    %296 = vmatprep.subr.bf16.mxu0 0
    %297 = vmatpush1.bf16.msra.mxu0 %v294
    %298 = vmatprep.subr.bf16.mxu0 0
    %299 = vmatpush1.bf16.msra.mxu0 0
    %300 = vmatprep.subr.bf16.mxu0 0
    %301 = vmatpush1.bf16.msra.mxu0 0
    %302 = vmatprep.subr.bf16.mxu0 0
    %303 = vmatpush1.bf16.msra.mxu0 0
    %304 = vmatprep.subr.bf16.mxu0 0
    %305 = vmatpush1.bf16.msra.mxu0 0
    %306 = vmatprep.subr.bf16.mxu0 0
    %307 = vmatpush1.bf16.msra.mxu0 0
    %308 = vmatprep.subr.bf16.mxu0 0
    %309 = vmatpush1.bf16.msra.mxu0 0
    %310 = vmatprep.subr.bf16.mxu0 0
    %311 = vmatpush1.bf16.msra.mxu0 0
    %312 = vmatprep.subr.bf16.mxu0 0
    %313 = vmatpush1.bf16.msra.mxu0 0
    %314 = vmatprep.subr.bf16.mxu0 0
    %315 = vmatpush1.bf16.msra.mxu0 0
    %316 = vmatprep.subr.bf16.mxu0 0
    %317 = vmatpush1.bf16.msra.mxu0 0
    %318 = vmatprep.subr.bf16.mxu0 0
    %319 = vmatpush1.bf16.msra.mxu0 0
    %320 = vmatprep.subr.bf16.mxu0 0
    %321 = vmatpush1.bf16.msra.mxu0 0
    %322 = vmatprep.subr.bf16.mxu0 0
    %323 = vmatpush1.bf16.msra.mxu0 0
    %324 = vmatprep.subr.bf16.mxu0 0
    %325 = vmatpush1.bf16.msra.mxu0 0
    %326 = vmatprep.subr.bf16.mxu0 0
    %327 = vmatpush1.bf16.msra.mxu0 0
    %328 = vmatprep.mubr.bf16.mxu0 0
    %329 = vmatmul.mubr.bf16.gmra.mrb[0].mxu0 %v290
    %v330 = vpop.f32.mrb[0].mxu0
    %v331 = vadd.f32 0.0, %v330
    %v332 = vpop.f32.mrb[0].mxu0
    %v333 = vpop.f32.mrb[0].mxu0
    %v334 = vpop.f32.mrb[0].mxu0
    %335 = vdwg.mxu0
    %v337 = vrot.slane %v266, 4
    %339 = vxpose.xlu0.c.b16.start [1/8] %v337, 128
    %340 = vxpose.xlu0.c.b16.cont [2/8] 0, 128
    %341 = vxpose.xlu0.c.b16.cont [3/8] 0, 128
    %342 = vxpose.xlu0.c.b16.cont [4/8] 0, 128
    %343 = vxpose.xlu0.c.b16.cont [5/8] 0, 128
    %344 = vxpose.xlu0.c.b16.cont [6/8] 0, 128
    %345 = vxpose.xlu0.c.b16.cont [7/8] 0, 128
    %346 = vxpose.xlu0.c.b16.end [8/8] 0, 128
    %v347 = vpop.trf.xlu0
    %v348 = vpop.trf.xlu0
    %v349 = vpop.trf.xlu0
    %v350 = vpop.trf.xlu0
    %v351 = vpop.trf.xlu0
    %v352 = vpop.trf.xlu0
    %v353 = vpop.trf.xlu0
    %v354 = vpop.trf.xlu0
    %v356 = vrot.slane %v268, 4
    %v358 = vsel %vm288, %v347, 0
    %v361 = vsel %vm292, %v356, 0
    %363 = vmatprep.subr.bf16.mxu0 0
    %364 = vmatpush1.bf16.msra.mxu0 %v361
    %365 = vmatprep.subr.bf16.mxu0 0
    %366 = vmatpush1.bf16.msra.mxu0 0
    %367 = vmatprep.subr.bf16.mxu0 0
    %368 = vmatpush1.bf16.msra.mxu0 0
    %369 = vmatprep.subr.bf16.mxu0 0
    %370 = vmatpush1.bf16.msra.mxu0 0
    %371 = vmatprep.subr.bf16.mxu0 0
    %372 = vmatpush1.bf16.msra.mxu0 0
    %373 = vmatprep.subr.bf16.mxu0 0
    %374 = vmatpush1.bf16.msra.mxu0 0
    %375 = vmatprep.subr.bf16.mxu0 0
    %376 = vmatpush1.bf16.msra.mxu0 0
    %377 = vmatprep.subr.bf16.mxu0 0
    %378 = vmatpush1.bf16.msra.mxu0 0
    %379 = vmatprep.subr.bf16.mxu0 0
    %380 = vmatpush1.bf16.msra.mxu0 0
    %381 = vmatprep.subr.bf16.mxu0 0
    %382 = vmatpush1.bf16.msra.mxu0 0
    %383 = vmatprep.subr.bf16.mxu0 0
    %384 = vmatpush1.bf16.msra.mxu0 0
    %385 = vmatprep.subr.bf16.mxu0 0
    %386 = vmatpush1.bf16.msra.mxu0 0
    %387 = vmatprep.subr.bf16.mxu0 0
    %388 = vmatpush1.bf16.msra.mxu0 0
    %389 = vmatprep.subr.bf16.mxu0 0
    %390 = vmatpush1.bf16.msra.mxu0 0
    %391 = vmatprep.subr.bf16.mxu0 0
    %392 = vmatpush1.bf16.msra.mxu0 0
    %393 = vmatprep.subr.bf16.mxu0 0
    %394 = vmatpush1.bf16.msra.mxu0 0
    %395 = vmatprep.mubr.bf16.mxu0 0
    %396 = vmatmul.mubr.bf16.gmra.mrb[0].mxu0 %v358
    %v397 = vpop.f32.mrb[0].mxu0
    %v398 = vadd.f32 0.0, %v397
    %v399 = vpop.f32.mrb[0].mxu0
    %v400 = vpop.f32.mrb[0].mxu0
    %v401 = vpop.f32.mrb[0].mxu0
    %402 = vdwg.mxu0
    %403 = vxpose.xlu0.c.b16.start [1/8] %v267, 128
    %404 = vxpose.xlu0.c.b16.cont [2/8] 0, 128
    %405 = vxpose.xlu0.c.b16.cont [3/8] 0, 128
    %406 = vxpose.xlu0.c.b16.cont [4/8] 0, 128
    %407 = vxpose.xlu0.c.b16.cont [5/8] 0, 128
    %408 = vxpose.xlu0.c.b16.cont [6/8] 0, 128
    %409 = vxpose.xlu0.c.b16.cont [7/8] 0, 128
    %410 = vxpose.xlu0.c.b16.end [8/8] 0, 128
    %v411 = vpop.trf.xlu0
    %v412 = vpop.trf.xlu0
    %v413 = vpop.trf.xlu0
    %v414 = vpop.trf.xlu0
    %v415 = vpop.trf.xlu0
    %v416 = vpop.trf.xlu0
    %v417 = vpop.trf.xlu0
    %v418 = vpop.trf.xlu0
    %v420 = vsel %vm288, %v411, 0
    %v423 = vsel %vm292, %v269, 0
    %425 = vmatprep.subr.bf16.mxu0 0
    %426 = vmatpush1.bf16.msra.mxu0 %v423
    %427 = vmatprep.subr.bf16.mxu0 0
    %428 = vmatpush1.bf16.msra.mxu0 0
    %429 = vmatprep.subr.bf16.mxu0 0
    %430 = vmatpush1.bf16.msra.mxu0 0
    %431 = vmatprep.subr.bf16.mxu0 0
    %432 = vmatpush1.bf16.msra.mxu0 0
    %433 = vmatprep.subr.bf16.mxu0 0
    %434 = vmatpush1.bf16.msra.mxu0 0
    %435 = vmatprep.subr.bf16.mxu0 0
    %436 = vmatpush1.bf16.msra.mxu0 0
    %437 = vmatprep.subr.bf16.mxu0 0
    %438 = vmatpush1.bf16.msra.mxu0 0
    %439 = vmatprep.subr.bf16.mxu0 0
    %440 = vmatpush1.bf16.msra.mxu0 0
    %441 = vmatprep.subr.bf16.mxu0 0
    %442 = vmatpush1.bf16.msra.mxu0 0
    %443 = vmatprep.subr.bf16.mxu0 0
    %444 = vmatpush1.bf16.msra.mxu0 0
    %445 = vmatprep.subr.bf16.mxu0 0
    %446 = vmatpush1.bf16.msra.mxu0 0
    %447 = vmatprep.subr.bf16.mxu0 0
    %448 = vmatpush1.bf16.msra.mxu0 0
    %449 = vmatprep.subr.bf16.mxu0 0
    %450 = vmatpush1.bf16.msra.mxu0 0
    %451 = vmatprep.subr.bf16.mxu0 0
    %452 = vmatpush1.bf16.msra.mxu0 0
    %453 = vmatprep.subr.bf16.mxu0 0
    %454 = vmatpush1.bf16.msra.mxu0 0
    %455 = vmatprep.subr.bf16.mxu0 0
    %456 = vmatpush1.bf16.msra.mxu0 0
    %457 = vmatprep.mubr.bf16.mxu0 0
    %458 = vmatmul.mubr.bf16.gmra.mrb[0].mxu0 %v420
    %v459 = vpop.f32.mrb[0].mxu0
    %v460 = vadd.f32 0.0, %v459
    %v461 = vpop.f32.mrb[0].mxu0
    %v462 = vpop.f32.mrb[0].mxu0
    %v463 = vpop.f32.mrb[0].mxu0
    %464 = vdwg.mxu0
    %v466 = vrot.slane %v267, 4
    %468 = vxpose.xlu0.c.b16.start [1/8] %v466, 128
    %469 = vxpose.xlu0.c.b16.cont [2/8] 0, 128
    %470 = vxpose.xlu0.c.b16.cont [3/8] 0, 128
    %471 = vxpose.xlu0.c.b16.cont [4/8] 0, 128
    %472 = vxpose.xlu0.c.b16.cont [5/8] 0, 128
    %473 = vxpose.xlu0.c.b16.cont [6/8] 0, 128
    %474 = vxpose.xlu0.c.b16.cont [7/8] 0, 128
    %475 = vxpose.xlu0.c.b16.end [8/8] 0, 128
    %v476 = vpop.trf.xlu0
    %v477 = vpop.trf.xlu0
    %v478 = vpop.trf.xlu0
    %v479 = vpop.trf.xlu0
    %v480 = vpop.trf.xlu0
    %v481 = vpop.trf.xlu0
    %v482 = vpop.trf.xlu0
    %v483 = vpop.trf.xlu0
    %v485 = vrot.slane %v269, 4
    %v487 = vsel %vm288, %v476, 0
    %v490 = vsel %vm292, %v485, 0
    %492 = vmatprep.subr.bf16.mxu0 0
    %493 = vmatpush1.bf16.msra.mxu0 %v490
    %494 = vmatprep.subr.bf16.mxu0 0
    %495 = vmatpush1.bf16.msra.mxu0 0
    %496 = vmatprep.subr.bf16.mxu0 0
    %497 = vmatpush1.bf16.msra.mxu0 0
    %498 = vmatprep.subr.bf16.mxu0 0
    %499 = vmatpush1.bf16.msra.mxu0 0
    %500 = vmatprep.subr.bf16.mxu0 0
    %501 = vmatpush1.bf16.msra.mxu0 0
    %502 = vmatprep.subr.bf16.mxu0 0
    %503 = vmatpush1.bf16.msra.mxu0 0
    %504 = vmatprep.subr.bf16.mxu0 0
    %505 = vmatpush1.bf16.msra.mxu0 0
    %506 = vmatprep.subr.bf16.mxu0 0
    %507 = vmatpush1.bf16.msra.mxu0 0
    %508 = vmatprep.subr.bf16.mxu0 0
    %509 = vmatpush1.bf16.msra.mxu0 0
    %510 = vmatprep.subr.bf16.mxu0 0
    %511 = vmatpush1.bf16.msra.mxu0 0
    %512 = vmatprep.subr.bf16.mxu0 0
    %513 = vmatpush1.bf16.msra.mxu0 0
    %514 = vmatprep.subr.bf16.mxu0 0
    %515 = vmatpush1.bf16.msra.mxu0 0
    %516 = vmatprep.subr.bf16.mxu0 0
    %517 = vmatpush1.bf16.msra.mxu0 0
    %518 = vmatprep.subr.bf16.mxu0 0
    %519 = vmatpush1.bf16.msra.mxu0 0
    %520 = vmatprep.subr.bf16.mxu0 0
    %521 = vmatpush1.bf16.msra.mxu0 0
    %522 = vmatprep.subr.bf16.mxu0 0
    %523 = vmatpush1.bf16.msra.mxu0 0
    %524 = vmatprep.mubr.bf16.mxu0 0
    %525 = vmatmul.mubr.bf16.gmra.mrb[0].mxu0 %v487
    %v526 = vpop.f32.mrb[0].mxu0
    %v527 = vadd.f32 0.0, %v526
    %v528 = vpop.f32.mrb[0].mxu0
    %v529 = vpop.f32.mrb[0].mxu0
    %v530 = vpop.f32.mrb[0].mxu0
    %531 = vdwg.mxu0
    %v532 = vpack.c.bf16 %v133, %v133
    %v534 = vsel %vm163, %v532, 0
    %536 = vmatprep.subr.bf16.mxu0 0
    %537 = vmatpush1.bf16.xpose.msra.mxu0 %v534
    %538 = vmatprep.subr.bf16.mxu0 0
    %539 = vmatpush1.bf16.xpose.msra.mxu0 0
    %540 = vmatprep.subr.bf16.mxu0 0
    %541 = vmatpush1.bf16.xpose.msra.mxu0 0
    %542 = vmatprep.subr.bf16.mxu0 0
    %543 = vmatpush1.bf16.xpose.msra.mxu0 0
    %544 = vmatprep.subr.bf16.mxu0 0
    %545 = vmatpush1.bf16.xpose.msra.mxu0 0
    %546 = vmatprep.subr.bf16.mxu0 0
    %547 = vmatpush1.bf16.xpose.msra.mxu0 0
    %548 = vmatprep.subr.bf16.mxu0 0
    %549 = vmatpush1.bf16.xpose.msra.mxu0 0
    %550 = vmatprep.subr.bf16.mxu0 0
    %551 = vmatpush1.bf16.xpose.msra.mxu0 0
    %552 = vmatprep.subr.bf16.mxu0 0
    %553 = vmatpush1.bf16.xpose.msra.mxu0 0
    %554 = vmatprep.subr.bf16.mxu0 0
    %555 = vmatpush1.bf16.xpose.msra.mxu0 0
    %556 = vmatprep.subr.bf16.mxu0 0
    %557 = vmatpush1.bf16.xpose.msra.mxu0 0
    %558 = vmatprep.subr.bf16.mxu0 0
    %559 = vmatpush1.bf16.xpose.msra.mxu0 0
    %560 = vmatprep.subr.bf16.mxu0 0
    %561 = vmatpush1.bf16.xpose.msra.mxu0 0
    %562 = vmatprep.subr.bf16.mxu0 0
    %563 = vmatpush1.bf16.xpose.msra.mxu0 0
    %564 = vmatprep.subr.bf16.mxu0 0
    %565 = vmatpush1.bf16.xpose.msra.mxu0 0
    %566 = vmatprep.subr.bf16.mxu0 0
    %567 = vmatpush1.bf16.xpose.msra.mxu0 0
    %568 = vmatprep.mubr.bf16.mxu0 0
    %569 = vmatmul.mubr.bf16.gmra.mrb[0].mxu0 %v165
    %v570 = vpop.f32.mrb[0].mxu0
    %v571 = vadd.f32 0.0, %v570
    %v572 = vpop.f32.mrb[0].mxu0
    %v573 = vpop.f32.mrb[0].mxu0
    %v574 = vadd.f32 0.0, %v573
    %v575 = vpop.f32.mrb[0].mxu0
    %576 = vmatprep.mubr.bf16.mxu0 0
    %577 = vmatmul.mubr.bf16.gmra.mrb[0].mxu0 %v168
    %v578 = vpop.f32.mrb[0].mxu0
    %v579 = vadd.f32 0.0, %v578
    %v580 = vpop.f32.mrb[0].mxu0
    %v581 = vpop.f32.mrb[0].mxu0
    %v582 = vadd.f32 0.0, %v581
    %v583 = vpop.f32.mrb[0].mxu0
    %584 = vmatprep.mubr.bf16.mxu0 0
    %585 = vmatmul.mubr.bf16.gmra.mrb[0].mxu0 %v171
    %v586 = vpop.f32.mrb[0].mxu0
    %v587 = vadd.f32 0.0, %v586
    %v588 = vpop.f32.mrb[0].mxu0
    %v589 = vpop.f32.mrb[0].mxu0
    %v590 = vadd.f32 0.0, %v589
    %v591 = vpop.f32.mrb[0].mxu0
    %592 = vmatprep.mubr.bf16.mxu0 0
    %593 = vmatmul.mubr.bf16.gmra.mrb[0].mxu0 %v174
    %v594 = vpop.f32.mrb[0].mxu0
    %v595 = vadd.f32 0.0, %v594
    %v596 = vpop.f32.mrb[0].mxu0
    %v597 = vpop.f32.mrb[0].mxu0
    %v598 = vadd.f32 0.0, %v597
    %v599 = vpop.f32.mrb[0].mxu0
    %600 = vmatprep.mubr.bf16.mxu0 0
    %601 = vmatmul.mubr.bf16.gmra.mrb[0].mxu0 %v177
    %v602 = vpop.f32.mrb[0].mxu0
    %v603 = vadd.f32 0.0, %v602
    %v604 = vpop.f32.mrb[0].mxu0
    %v605 = vpop.f32.mrb[0].mxu0
    %v606 = vadd.f32 0.0, %v605
    %v607 = vpop.f32.mrb[0].mxu0
    %608 = vmatprep.mubr.bf16.mxu0 0
    %609 = vmatmul.mubr.bf16.gmra.mrb[0].mxu0 %v180
    %v610 = vpop.f32.mrb[0].mxu0
    %v611 = vadd.f32 0.0, %v610
    %v612 = vpop.f32.mrb[0].mxu0
    %v613 = vpop.f32.mrb[0].mxu0
    %v614 = vadd.f32 0.0, %v613
    %v615 = vpop.f32.mrb[0].mxu0
    %616 = vdwg.mxu0
    %v617 = vpack.c.bf16 %v574, %v571
    %v618 = vpack.c.bf16 %v582, %v579
    %v619 = vpack.c.bf16 %v590, %v587
    %v620 = vpack.c.bf16 %v598, %v595
    %v621 = vpack.c.bf16 %v606, %v603
    %v622 = vpack.c.bf16 %v614, %v611
    %623 = vxpose.xlu0.c.b16.start [1/8] %v617, 128
    %624 = vxpose.xlu0.c.b16.cont [2/8] 0, 128
    %625 = vxpose.xlu0.c.b16.cont [3/8] 0, 128
    %626 = vxpose.xlu0.c.b16.cont [4/8] 0, 128
    %627 = vxpose.xlu0.c.b16.cont [5/8] 0, 128
    %628 = vxpose.xlu0.c.b16.cont [6/8] 0, 128
    %629 = vxpose.xlu0.c.b16.cont [7/8] 0, 128
    %630 = vxpose.xlu0.c.b16.end [8/8] 0, 128
    %v631 = vpop.trf.xlu0
    %v632 = vpop.trf.xlu0
    %v633 = vpop.trf.xlu0
    %v634 = vpop.trf.xlu0
    %v635 = vpop.trf.xlu0
    %v636 = vpop.trf.xlu0
    %v637 = vpop.trf.xlu0
    %v638 = vpop.trf.xlu0
    %v640 = vsel %vm288, %v631, 0
    %v643 = vsel %vm292, %v619, 0
    %645 = vmatprep.subr.bf16.mxu0 0
    %646 = vmatpush1.bf16.msra.mxu0 %v643
    %647 = vmatprep.subr.bf16.mxu0 0
    %648 = vmatpush1.bf16.msra.mxu0 0
    %649 = vmatprep.subr.bf16.mxu0 0
    %650 = vmatpush1.bf16.msra.mxu0 0
    %651 = vmatprep.subr.bf16.mxu0 0
    %652 = vmatpush1.bf16.msra.mxu0 0
    %653 = vmatprep.subr.bf16.mxu0 0
    %654 = vmatpush1.bf16.msra.mxu0 0
    %655 = vmatprep.subr.bf16.mxu0 0
    %656 = vmatpush1.bf16.msra.mxu0 0
    %657 = vmatprep.subr.bf16.mxu0 0
    %658 = vmatpush1.bf16.msra.mxu0 0
    %659 = vmatprep.subr.bf16.mxu0 0
    %660 = vmatpush1.bf16.msra.mxu0 0
    %661 = vmatprep.subr.bf16.mxu0 0
    %662 = vmatpush1.bf16.msra.mxu0 0
    %663 = vmatprep.subr.bf16.mxu0 0
    %664 = vmatpush1.bf16.msra.mxu0 0
    %665 = vmatprep.subr.bf16.mxu0 0
    %666 = vmatpush1.bf16.msra.mxu0 0
    %667 = vmatprep.subr.bf16.mxu0 0
    %668 = vmatpush1.bf16.msra.mxu0 0
    %669 = vmatprep.subr.bf16.mxu0 0
    %670 = vmatpush1.bf16.msra.mxu0 0
    %671 = vmatprep.subr.bf16.mxu0 0
    %672 = vmatpush1.bf16.msra.mxu0 0
    %673 = vmatprep.subr.bf16.mxu0 0
    %674 = vmatpush1.bf16.msra.mxu0 0
    %675 = vmatprep.subr.bf16.mxu0 0
    %676 = vmatpush1.bf16.msra.mxu0 0
    %677 = vmatprep.mubr.bf16.mxu0 0
    %678 = vmatmul.mubr.bf16.gmra.mrb[0].mxu0 %v640
    %v679 = vpop.f32.mrb[0].mxu0
    %v680 = vadd.f32 0.0, %v679
    %v681 = vpop.f32.mrb[0].mxu0
    %v682 = vpop.f32.mrb[0].mxu0
    %v683 = vpop.f32.mrb[0].mxu0
    %684 = vdwg.mxu0
    %v686 = vrot.slane %v617, 4
    %688 = vxpose.xlu0.c.b16.start [1/8] %v686, 128
    %689 = vxpose.xlu0.c.b16.cont [2/8] 0, 128
    %690 = vxpose.xlu0.c.b16.cont [3/8] 0, 128
    %691 = vxpose.xlu0.c.b16.cont [4/8] 0, 128
    %692 = vxpose.xlu0.c.b16.cont [5/8] 0, 128
    %693 = vxpose.xlu0.c.b16.cont [6/8] 0, 128
    %694 = vxpose.xlu0.c.b16.cont [7/8] 0, 128
    %695 = vxpose.xlu0.c.b16.end [8/8] 0, 128
    %v696 = vpop.trf.xlu0
    %v697 = vpop.trf.xlu0
    %v698 = vpop.trf.xlu0
    %v699 = vpop.trf.xlu0
    %v700 = vpop.trf.xlu0
    %v701 = vpop.trf.xlu0
    %v702 = vpop.trf.xlu0
    %v703 = vpop.trf.xlu0
    %v705 = vrot.slane %v619, 4
    %v707 = vsel %vm288, %v696, 0
    %v710 = vsel %vm292, %v705, 0
    %712 = vmatprep.subr.bf16.mxu0 0
    %713 = vmatpush1.bf16.msra.mxu0 %v710
    %714 = vmatprep.subr.bf16.mxu0 0
    %715 = vmatpush1.bf16.msra.mxu0 0
    %716 = vmatprep.subr.bf16.mxu0 0
    %717 = vmatpush1.bf16.msra.mxu0 0
    %718 = vmatprep.subr.bf16.mxu0 0
    %719 = vmatpush1.bf16.msra.mxu0 0
    %720 = vmatprep.subr.bf16.mxu0 0
    %721 = vmatpush1.bf16.msra.mxu0 0
    %722 = vmatprep.subr.bf16.mxu0 0
    %723 = vmatpush1.bf16.msra.mxu0 0
    %724 = vmatprep.subr.bf16.mxu0 0
    %725 = vmatpush1.bf16.msra.mxu0 0
    %726 = vmatprep.subr.bf16.mxu0 0
    %727 = vmatpush1.bf16.msra.mxu0 0
    %728 = vmatprep.subr.bf16.mxu0 0
    %729 = vmatpush1.bf16.msra.mxu0 0
    %730 = vmatprep.subr.bf16.mxu0 0
    %731 = vmatpush1.bf16.msra.mxu0 0
    %732 = vmatprep.subr.bf16.mxu0 0
    %733 = vmatpush1.bf16.msra.mxu0 0
    %734 = vmatprep.subr.bf16.mxu0 0
    %735 = vmatpush1.bf16.msra.mxu0 0
    %736 = vmatprep.subr.bf16.mxu0 0
    %737 = vmatpush1.bf16.msra.mxu0 0
    %738 = vmatprep.subr.bf16.mxu0 0
    %739 = vmatpush1.bf16.msra.mxu0 0
    %740 = vmatprep.subr.bf16.mxu0 0
    %741 = vmatpush1.bf16.msra.mxu0 0
    %742 = vmatprep.subr.bf16.mxu0 0
    %743 = vmatpush1.bf16.msra.mxu0 0
    %744 = vmatprep.mubr.bf16.mxu0 0
    %745 = vmatmul.mubr.bf16.gmra.mrb[0].mxu0 %v707
    %v746 = vpop.f32.mrb[0].mxu0
    %v747 = vadd.f32 0.0, %v746
    %v748 = vpop.f32.mrb[0].mxu0
    %v749 = vpop.f32.mrb[0].mxu0
    %v750 = vpop.f32.mrb[0].mxu0
    %751 = vdwg.mxu0
    %752 = vxpose.xlu0.c.b16.start [1/8] %v618, 128
    %753 = vxpose.xlu0.c.b16.cont [2/8] 0, 128
    %754 = vxpose.xlu0.c.b16.cont [3/8] 0, 128
    %755 = vxpose.xlu0.c.b16.cont [4/8] 0, 128
    %756 = vxpose.xlu0.c.b16.cont [5/8] 0, 128
    %757 = vxpose.xlu0.c.b16.cont [6/8] 0, 128
    %758 = vxpose.xlu0.c.b16.cont [7/8] 0, 128
    %759 = vxpose.xlu0.c.b16.end [8/8] 0, 128
    %v760 = vpop.trf.xlu0
    %v761 = vpop.trf.xlu0
    %v762 = vpop.trf.xlu0
    %v763 = vpop.trf.xlu0
    %v764 = vpop.trf.xlu0
    %v765 = vpop.trf.xlu0
    %v766 = vpop.trf.xlu0
    %v767 = vpop.trf.xlu0
    %v769 = vsel %vm288, %v760, 0
    %v772 = vsel %vm292, %v620, 0
    %774 = vmatprep.subr.bf16.mxu0 0
    %775 = vmatpush1.bf16.msra.mxu0 %v772
    %776 = vmatprep.subr.bf16.mxu0 0
    %777 = vmatpush1.bf16.msra.mxu0 0
    %778 = vmatprep.subr.bf16.mxu0 0
    %779 = vmatpush1.bf16.msra.mxu0 0
    %780 = vmatprep.subr.bf16.mxu0 0
    %781 = vmatpush1.bf16.msra.mxu0 0
    %782 = vmatprep.subr.bf16.mxu0 0
    %783 = vmatpush1.bf16.msra.mxu0 0
    %784 = vmatprep.subr.bf16.mxu0 0
    %785 = vmatpush1.bf16.msra.mxu0 0
    %786 = vmatprep.subr.bf16.mxu0 0
    %787 = vmatpush1.bf16.msra.mxu0 0
    %788 = vmatprep.subr.bf16.mxu0 0
    %789 = vmatpush1.bf16.msra.mxu0 0
    %790 = vmatprep.subr.bf16.mxu0 0
    %791 = vmatpush1.bf16.msra.mxu0 0
    %792 = vmatprep.subr.bf16.mxu0 0
    %793 = vmatpush1.bf16.msra.mxu0 0
    %794 = vmatprep.subr.bf16.mxu0 0
    %795 = vmatpush1.bf16.msra.mxu0 0
    %796 = vmatprep.subr.bf16.mxu0 0
    %797 = vmatpush1.bf16.msra.mxu0 0
    %798 = vmatprep.subr.bf16.mxu0 0
    %799 = vmatpush1.bf16.msra.mxu0 0
    %800 = vmatprep.subr.bf16.mxu0 0
    %801 = vmatpush1.bf16.msra.mxu0 0
    %802 = vmatprep.subr.bf16.mxu0 0
    %803 = vmatpush1.bf16.msra.mxu0 0
    %804 = vmatprep.subr.bf16.mxu0 0
    %805 = vmatpush1.bf16.msra.mxu0 0
    %806 = vmatprep.mubr.bf16.mxu0 0
    %807 = vmatmul.mubr.bf16.gmra.mrb[0].mxu0 %v769
    %v808 = vpop.f32.mrb[0].mxu0
    %v809 = vadd.f32 0.0, %v808
    %v810 = vpop.f32.mrb[0].mxu0
    %v811 = vpop.f32.mrb[0].mxu0
    %v812 = vpop.f32.mrb[0].mxu0
    %813 = vdwg.mxu0
    %v815 = vrot.slane %v618, 4
    %817 = vxpose.xlu0.c.b16.start [1/8] %v815, 128
    %818 = vxpose.xlu0.c.b16.cont [2/8] 0, 128
    %819 = vxpose.xlu0.c.b16.cont [3/8] 0, 128
    %820 = vxpose.xlu0.c.b16.cont [4/8] 0, 128
    %821 = vxpose.xlu0.c.b16.cont [5/8] 0, 128
    %822 = vxpose.xlu0.c.b16.cont [6/8] 0, 128
    %823 = vxpose.xlu0.c.b16.cont [7/8] 0, 128
    %824 = vxpose.xlu0.c.b16.end [8/8] 0, 128
    %v825 = vpop.trf.xlu0
    %v826 = vpop.trf.xlu0
    %v827 = vpop.trf.xlu0
    %v828 = vpop.trf.xlu0
    %v829 = vpop.trf.xlu0
    %v830 = vpop.trf.xlu0
    %v831 = vpop.trf.xlu0
    %v832 = vpop.trf.xlu0
    %v834 = vrot.slane %v620, 4
    %v836 = vsel %vm288, %v825, 0
    %v839 = vsel %vm292, %v834, 0
    %841 = vmatprep.subr.bf16.mxu0 0
    %842 = vmatpush1.bf16.msra.mxu0 %v839
    %843 = vmatprep.subr.bf16.mxu0 0
    %844 = vmatpush1.bf16.msra.mxu0 0
    %845 = vmatprep.subr.bf16.mxu0 0
    %846 = vmatpush1.bf16.msra.mxu0 0
    %847 = vmatprep.subr.bf16.mxu0 0
    %848 = vmatpush1.bf16.msra.mxu0 0
    %849 = vmatprep.subr.bf16.mxu0 0
    %850 = vmatpush1.bf16.msra.mxu0 0
    %851 = vmatprep.subr.bf16.mxu0 0
    %852 = vmatpush1.bf16.msra.mxu0 0
    %853 = vmatprep.subr.bf16.mxu0 0
    %854 = vmatpush1.bf16.msra.mxu0 0
    %855 = vmatprep.subr.bf16.mxu0 0
    %856 = vmatpush1.bf16.msra.mxu0 0
    %857 = vmatprep.subr.bf16.mxu0 0
    %858 = vmatpush1.bf16.msra.mxu0 0
    %859 = vmatprep.subr.bf16.mxu0 0
    %860 = vmatpush1.bf16.msra.mxu0 0
    %861 = vmatprep.subr.bf16.mxu0 0
    %862 = vmatpush1.bf16.msra.mxu0 0
    %863 = vmatprep.subr.bf16.mxu0 0
    %864 = vmatpush1.bf16.msra.mxu0 0
    %865 = vmatprep.subr.bf16.mxu0 0
    %866 = vmatpush1.bf16.msra.mxu0 0
    %867 = vmatprep.subr.bf16.mxu0 0
    %868 = vmatpush1.bf16.msra.mxu0 0
    %869 = vmatprep.subr.bf16.mxu0 0
    %870 = vmatpush1.bf16.msra.mxu0 0
    %871 = vmatprep.subr.bf16.mxu0 0
    %872 = vmatpush1.bf16.msra.mxu0 0
    %873 = vmatprep.mubr.bf16.mxu0 0
    %874 = vmatmul.mubr.bf16.gmra.mrb[0].mxu0 %v836
    %v875 = vpop.f32.mrb[0].mxu0
    %v876 = vadd.f32 0.0, %v875
    %v877 = vpop.f32.mrb[0].mxu0
    %v878 = vpop.f32.mrb[0].mxu0
    %v879 = vpop.f32.mrb[0].mxu0
    %880 = vdwg.mxu0
    %v881 = vsel %vm288, %v331, -inf
    %882 = vmax.xlane.f32.xlu0 %v881
    %v883 = vpop.xlane.xlu0 %882
    %v884 = vsel %vm288, %v398, -inf
    %885 = vmax.xlane.f32.xlu0 %v884
    %v886 = vpop.xlane.xlu0 %885
    %v887 = vsel %vm288, %v460, -inf
    %888 = vmax.xlane.f32.xlu0 %v887
    %v889 = vpop.xlane.xlu0 %888
    %v890 = vsel %vm288, %v527, -inf
    %891 = vmax.xlane.f32.xlu0 %v890
    %v892 = vpop.xlane.xlu0 %891
    %v893 = vsel %vm288, %v680, -inf
    %894 = vmax.xlane.f32.xlu0 %v893
    %v895 = vpop.xlane.xlu0 %894
    %v896 = vsel %vm288, %v747, -inf
    %897 = vmax.xlane.f32.xlu0 %v896
    %v898 = vpop.xlane.xlu0 %897
    %v899 = vsel %vm288, %v809, -inf
    %900 = vmax.xlane.f32.xlu0 %v899
    %v901 = vpop.xlane.xlu0 %900
    %v902 = vsel %vm288, %v876, -inf
    %903 = vmax.xlane.f32.xlu0 %v902
    %v904 = vpop.xlane.xlu0 %903
    %v905 = vsub.f32 %v331, %v883
    %v906 = vsub.f32 %v398, %v886
    %v907 = vsub.f32 %v460, %v889
    %v908 = vsub.f32 %v527, %v892
    %v909 = vsub.f32 %v680, %v895
    %v910 = vsub.f32 %v747, %v898
    %v911 = vsub.f32 %v809, %v901
    %v912 = vsub.f32 %v876, %v904
    %v913 = vmul.f32 %v905, 1.442695
    %v914 = vpow.pop %v913
    %v915 = vmul.f32 %v906, 1.442695
    %v916 = vpow.pop %v915
    %v917 = vmul.f32 %v907, 1.442695
    %v918 = vpow.pop %v917
    %v919 = vmul.f32 %v908, 1.442695
    %v920 = vpow.pop %v919
    %v921 = vmul.f32 %v909, 1.442695
    %v922 = vpow.pop %v921
    %v923 = vmul.f32 %v910, 1.442695
    %v924 = vpow.pop %v923
    %v925 = vmul.f32 %v911, 1.442695
    %v926 = vpow.pop %v925
    %v927 = vmul.f32 %v912, 1.442695
    %v928 = vpow.pop %v927
    %v929 = vsel %vm288, %v914, 0.0
    %930 = vadd.xlane.f32.xlu0 %v929
    %v931 = vpop.xlane.xlu0 %930
    %v932 = vsel %vm288, %v916, 0.0
    %933 = vadd.xlane.f32.xlu0 %v932
    %v934 = vpop.xlane.xlu0 %933
    %v935 = vsel %vm288, %v918, 0.0
    %936 = vadd.xlane.f32.xlu0 %v935
    %v937 = vpop.xlane.xlu0 %936
    %v938 = vsel %vm288, %v920, 0.0
    %939 = vadd.xlane.f32.xlu0 %v938
    %v940 = vpop.xlane.xlu0 %939
    %v941 = vsel %vm288, %v922, 0.0
    %942 = vadd.xlane.f32.xlu0 %v941
    %v943 = vpop.xlane.xlu0 %942
    %v944 = vsel %vm288, %v924, 0.0
    %945 = vadd.xlane.f32.xlu0 %v944
    %v946 = vpop.xlane.xlu0 %945
    %v947 = vsel %vm288, %v926, 0.0
    %948 = vadd.xlane.f32.xlu0 %v947
    %v949 = vpop.xlane.xlu0 %948
    %v950 = vsel %vm288, %v928, 0.0
    %951 = vadd.xlane.f32.xlu0 %v950
    %v952 = vpop.xlane.xlu0 %951
    %v953 = vrcp.pop %v931
    %v954 = vrcp.pop %v934
    %v955 = vrcp.pop %v937
    %v956 = vrcp.pop %v940
    %v957 = vrcp.pop %v943
    %v958 = vrcp.pop %v946
    %v959 = vrcp.pop %v949
    %v960 = vrcp.pop %v952
    %v961 = vmul.f32 %v914, %v953
    %v962 = vmul.f32 %v916, %v954
    %v963 = vmul.f32 %v918, %v955
    %v964 = vmul.f32 %v920, %v956
    %v965 = vmul.f32 %v922, %v957
    %v966 = vmul.f32 %v924, %v958
    %v967 = vmul.f32 %v926, %v959
    %v968 = vmul.f32 %v928, %v960
    %v969 = vpack.c.bf16 %v962, %v961
    %v970 = vpack.c.bf16 %v964, %v963
    %v971 = vpack.c.bf16 %v966, %v965
    %v972 = vpack.c.bf16 %v968, %v967
    %v974 = vsel %vm288, %v270, 0
    %v977 = vsel %vm288, %v969, 0
    %979 = vmatprep.subr.bf16.mxu0 0
    %980 = vmatpush1.bf16.xpose.msra.mxu0 %v977
    %981 = vmatprep.subr.bf16.mxu0 0
    %982 = vmatpush1.bf16.xpose.msra.mxu0 0
    %983 = vmatprep.subr.bf16.mxu0 0
    %984 = vmatpush1.bf16.xpose.msra.mxu0 0
    %985 = vmatprep.subr.bf16.mxu0 0
    %986 = vmatpush1.bf16.xpose.msra.mxu0 0
    %987 = vmatprep.subr.bf16.mxu0 0
    %988 = vmatpush1.bf16.xpose.msra.mxu0 0
    %989 = vmatprep.subr.bf16.mxu0 0
    %990 = vmatpush1.bf16.xpose.msra.mxu0 0
    %991 = vmatprep.subr.bf16.mxu0 0
    %992 = vmatpush1.bf16.xpose.msra.mxu0 0
    %993 = vmatprep.subr.bf16.mxu0 0
    %994 = vmatpush1.bf16.xpose.msra.mxu0 0
    %995 = vmatprep.subr.bf16.mxu0 0
    %996 = vmatpush1.bf16.xpose.msra.mxu0 0
    %997 = vmatprep.subr.bf16.mxu0 0
    %998 = vmatpush1.bf16.xpose.msra.mxu0 0
    %999 = vmatprep.subr.bf16.mxu0 0
    %1000 = vmatpush1.bf16.xpose.msra.mxu0 0
    %1001 = vmatprep.subr.bf16.mxu0 0
    %1002 = vmatpush1.bf16.xpose.msra.mxu0 0
    %1003 = vmatprep.subr.bf16.mxu0 0
    %1004 = vmatpush1.bf16.xpose.msra.mxu0 0
    %1005 = vmatprep.subr.bf16.mxu0 0
    %1006 = vmatpush1.bf16.xpose.msra.mxu0 0
    %1007 = vmatprep.subr.bf16.mxu0 0
    %1008 = vmatpush1.bf16.xpose.msra.mxu0 0
    %1009 = vmatprep.subr.bf16.mxu0 0
    %1010 = vmatpush1.bf16.xpose.msra.mxu0 0
    %1011 = vmatprep.mubr.bf16.mxu0 0
    %1012 = vmatmul.mubr.bf16.gmra.mrb[0].mxu0 %v974
    %v1013 = vpop.f32.mrb[0].mxu0
    %v1014 = vadd.f32 0.0, %v1013
    %v1015 = vpop.f32.mrb[0].mxu0
    %v1016 = vpop.f32.mrb[0].mxu0
    %v1017 = vpop.f32.mrb[0].mxu0
    %1018 = vdwg.mxu0
    %v1020 = vrot.slane %v270, 4
    %v1022 = vrot.slane %v969, 4
    %v1024 = vsel %vm288, %v1020, 0
    %v1027 = vsel %vm288, %v1022, 0
    %1029 = vmatprep.subr.bf16.mxu0 0
    %1030 = vmatpush1.bf16.xpose.msra.mxu0 %v1027
    %1031 = vmatprep.subr.bf16.mxu0 0
    %1032 = vmatpush1.bf16.xpose.msra.mxu0 0
    %1033 = vmatprep.subr.bf16.mxu0 0
    %1034 = vmatpush1.bf16.xpose.msra.mxu0 0
    %1035 = vmatprep.subr.bf16.mxu0 0
    %1036 = vmatpush1.bf16.xpose.msra.mxu0 0
    %1037 = vmatprep.subr.bf16.mxu0 0
    %1038 = vmatpush1.bf16.xpose.msra.mxu0 0
    %1039 = vmatprep.subr.bf16.mxu0 0
    %1040 = vmatpush1.bf16.xpose.msra.mxu0 0
    %1041 = vmatprep.subr.bf16.mxu0 0
    %1042 = vmatpush1.bf16.xpose.msra.mxu0 0
    %1043 = vmatprep.subr.bf16.mxu0 0
    %1044 = vmatpush1.bf16.xpose.msra.mxu0 0
    %1045 = vmatprep.subr.bf16.mxu0 0
    %1046 = vmatpush1.bf16.xpose.msra.mxu0 0
    %1047 = vmatprep.subr.bf16.mxu0 0
    %1048 = vmatpush1.bf16.xpose.msra.mxu0 0
    %1049 = vmatprep.subr.bf16.mxu0 0
    %1050 = vmatpush1.bf16.xpose.msra.mxu0 0
    %1051 = vmatprep.subr.bf16.mxu0 0
    %1052 = vmatpush1.bf16.xpose.msra.mxu0 0
    %1053 = vmatprep.subr.bf16.mxu0 0
    %1054 = vmatpush1.bf16.xpose.msra.mxu0 0
    %1055 = vmatprep.subr.bf16.mxu0 0
    %1056 = vmatpush1.bf16.xpose.msra.mxu0 0
    %1057 = vmatprep.subr.bf16.mxu0 0
    %1058 = vmatpush1.bf16.xpose.msra.mxu0 0
    %1059 = vmatprep.subr.bf16.mxu0 0
    %1060 = vmatpush1.bf16.xpose.msra.mxu0 0
    %1061 = vmatprep.mubr.bf16.mxu0 0
    %1062 = vmatmul.mubr.bf16.gmra.mrb[0].mxu0 %v1024
    %v1063 = vpop.f32.mrb[0].mxu0
    %v1064 = vadd.f32 0.0, %v1063
    %v1065 = vpop.f32.mrb[0].mxu0
    %v1066 = vpop.f32.mrb[0].mxu0
    %v1067 = vpop.f32.mrb[0].mxu0
    %1068 = vdwg.mxu0
    %v1070 = vsel %vm288, %v271, 0
    %v1073 = vsel %vm288, %v970, 0
    %1075 = vmatprep.subr.bf16.mxu0 0
    %1076 = vmatpush1.bf16.xpose.msra.mxu0 %v1073
    %1077 = vmatprep.subr.bf16.mxu0 0
    %1078 = vmatpush1.bf16.xpose.msra.mxu0 0
    %1079 = vmatprep.subr.bf16.mxu0 0
    %1080 = vmatpush1.bf16.xpose.msra.mxu0 0
    %1081 = vmatprep.subr.bf16.mxu0 0
    %1082 = vmatpush1.bf16.xpose.msra.mxu0 0
    %1083 = vmatprep.subr.bf16.mxu0 0
    %1084 = vmatpush1.bf16.xpose.msra.mxu0 0
    %1085 = vmatprep.subr.bf16.mxu0 0
    %1086 = vmatpush1.bf16.xpose.msra.mxu0 0
    %1087 = vmatprep.subr.bf16.mxu0 0
    %1088 = vmatpush1.bf16.xpose.msra.mxu0 0
    %1089 = vmatprep.subr.bf16.mxu0 0
    %1090 = vmatpush1.bf16.xpose.msra.mxu0 0
    %1091 = vmatprep.subr.bf16.mxu0 0
    %1092 = vmatpush1.bf16.xpose.msra.mxu0 0
    %1093 = vmatprep.subr.bf16.mxu0 0
    %1094 = vmatpush1.bf16.xpose.msra.mxu0 0
    %1095 = vmatprep.subr.bf16.mxu0 0
    %1096 = vmatpush1.bf16.xpose.msra.mxu0 0
    %1097 = vmatprep.subr.bf16.mxu0 0
    %1098 = vmatpush1.bf16.xpose.msra.mxu0 0
    %1099 = vmatprep.subr.bf16.mxu0 0
    %1100 = vmatpush1.bf16.xpose.msra.mxu0 0
    %1101 = vmatprep.subr.bf16.mxu0 0
    %1102 = vmatpush1.bf16.xpose.msra.mxu0 0
    %1103 = vmatprep.subr.bf16.mxu0 0
    %1104 = vmatpush1.bf16.xpose.msra.mxu0 0
    %1105 = vmatprep.subr.bf16.mxu0 0
    %1106 = vmatpush1.bf16.xpose.msra.mxu0 0
    %1107 = vmatprep.mubr.bf16.mxu0 0
    %1108 = vmatmul.mubr.bf16.gmra.mrb[0].mxu0 %v1070
    %v1109 = vpop.f32.mrb[0].mxu0
    %v1110 = vadd.f32 0.0, %v1109
    %v1111 = vpop.f32.mrb[0].mxu0
    %v1112 = vpop.f32.mrb[0].mxu0
    %v1113 = vpop.f32.mrb[0].mxu0
    %1114 = vdwg.mxu0
    %v1116 = vrot.slane %v271, 4
    %v1118 = vrot.slane %v970, 4
    %v1120 = vsel %vm288, %v1116, 0
    %v1123 = vsel %vm288, %v1118, 0
    %1125 = vmatprep.subr.bf16.mxu0 0
    %1126 = vmatpush1.bf16.xpose.msra.mxu0 %v1123
    %1127 = vmatprep.subr.bf16.mxu0 0
    %1128 = vmatpush1.bf16.xpose.msra.mxu0 0
    %1129 = vmatprep.subr.bf16.mxu0 0
    %1130 = vmatpush1.bf16.xpose.msra.mxu0 0
    %1131 = vmatprep.subr.bf16.mxu0 0
    %1132 = vmatpush1.bf16.xpose.msra.mxu0 0
    %1133 = vmatprep.subr.bf16.mxu0 0
    %1134 = vmatpush1.bf16.xpose.msra.mxu0 0
    %1135 = vmatprep.subr.bf16.mxu0 0
    %1136 = vmatpush1.bf16.xpose.msra.mxu0 0
    %1137 = vmatprep.subr.bf16.mxu0 0
    %1138 = vmatpush1.bf16.xpose.msra.mxu0 0
    %1139 = vmatprep.subr.bf16.mxu0 0
    %1140 = vmatpush1.bf16.xpose.msra.mxu0 0
    %1141 = vmatprep.subr.bf16.mxu0 0
    %1142 = vmatpush1.bf16.xpose.msra.mxu0 0
    %1143 = vmatprep.subr.bf16.mxu0 0
    %1144 = vmatpush1.bf16.xpose.msra.mxu0 0
    %1145 = vmatprep.subr.bf16.mxu0 0
    %1146 = vmatpush1.bf16.xpose.msra.mxu0 0
    %1147 = vmatprep.subr.bf16.mxu0 0
    %1148 = vmatpush1.bf16.xpose.msra.mxu0 0
    %1149 = vmatprep.subr.bf16.mxu0 0
    %1150 = vmatpush1.bf16.xpose.msra.mxu0 0
    %1151 = vmatprep.subr.bf16.mxu0 0
    %1152 = vmatpush1.bf16.xpose.msra.mxu0 0
    %1153 = vmatprep.subr.bf16.mxu0 0
    %1154 = vmatpush1.bf16.xpose.msra.mxu0 0
    %1155 = vmatprep.subr.bf16.mxu0 0
    %1156 = vmatpush1.bf16.xpose.msra.mxu0 0
    %1157 = vmatprep.mubr.bf16.mxu0 0
    %1158 = vmatmul.mubr.bf16.gmra.mrb[0].mxu0 %v1120
    %v1159 = vpop.f32.mrb[0].mxu0
    %v1160 = vadd.f32 0.0, %v1159
    %v1161 = vpop.f32.mrb[0].mxu0
    %v1162 = vpop.f32.mrb[0].mxu0
    %v1163 = vpop.f32.mrb[0].mxu0
    %1164 = vdwg.mxu0
    %v1165 = vpack.c.bf16 %v1064, %v1014
    %v1166 = vpack.c.bf16 %v1160, %v1110
    %1167 = vxpose.xlu0.c.b16.start [1/8] %v1165, 128
    %1168 = vxpose.xlu0.c.b16.cont [2/8] %v1166, 128
    %1169 = vxpose.xlu0.c.b16.cont [3/8] 0, 128
    %1170 = vxpose.xlu0.c.b16.cont [4/8] 0, 128
    %1171 = vxpose.xlu0.c.b16.cont [5/8] 0, 128
    %1172 = vxpose.xlu0.c.b16.cont [6/8] 0, 128
    %1173 = vxpose.xlu0.c.b16.cont [7/8] 0, 128
    %1174 = vxpose.xlu0.c.b16.end [8/8] 0, 128
    %v1175 = vpop.trf.xlu0
    %v1176 = vpop.trf.xlu0
    %v1177 = vpop.trf.xlu0
    %v1178 = vpop.trf.xlu0
    %v1179 = vpop.trf.xlu0
    %v1180 = vpop.trf.xlu0
    %v1181 = vpop.trf.xlu0
    %v1182 = vpop.trf.xlu0
    %v1187 = vunpack.c.l.b16 %v89
    %v1188 = vunpack.c.l.b16 %v90
    %v1189 = vunpack.c.l.b16 %v91
    %v1190 = vunpack.c.l.b16 %v92
    %v1191 = vpack.c.b16 %v1188, %v1187
    %v1192 = vpack.c.b16 %v1190, %v1189
    %v1196 = vsel %vm163, %v1175, 0
    %1198 = vmatprep.subr.bf16.mxu0 0
    %1199 = vmatpush1.bf16.msra.mxu0 %v1191
    %1200 = vmatprep.subr.bf16.mxu0 0
    %1201 = vmatpush1.bf16.msra.mxu0 %v1192
    %1202 = vmatprep.subr.bf16.mxu0 0
    %1203 = vmatpush1.bf16.msra.mxu0 0
    %1204 = vmatprep.subr.bf16.mxu0 0
    %1205 = vmatpush1.bf16.msra.mxu0 0
    %1206 = vmatprep.subr.bf16.mxu0 0
    %1207 = vmatpush1.bf16.msra.mxu0 0
    %1208 = vmatprep.subr.bf16.mxu0 0
    %1209 = vmatpush1.bf16.msra.mxu0 0
    %1210 = vmatprep.subr.bf16.mxu0 0
    %1211 = vmatpush1.bf16.msra.mxu0 0
    %1212 = vmatprep.subr.bf16.mxu0 0
    %1213 = vmatpush1.bf16.msra.mxu0 0
    %1214 = vmatprep.subr.bf16.mxu0 0
    %1215 = vmatpush1.bf16.msra.mxu0 0
    %1216 = vmatprep.subr.bf16.mxu0 0
    %1217 = vmatpush1.bf16.msra.mxu0 0
    %1218 = vmatprep.subr.bf16.mxu0 0
    %1219 = vmatpush1.bf16.msra.mxu0 0
    %1220 = vmatprep.subr.bf16.mxu0 0
    %1221 = vmatpush1.bf16.msra.mxu0 0
    %1222 = vmatprep.subr.bf16.mxu0 0
    %1223 = vmatpush1.bf16.msra.mxu0 0
    %1224 = vmatprep.subr.bf16.mxu0 0
    %1225 = vmatpush1.bf16.msra.mxu0 0
    %1226 = vmatprep.subr.bf16.mxu0 0
    %1227 = vmatpush1.bf16.msra.mxu0 0
    %1228 = vmatprep.subr.bf16.mxu0 0
    %1229 = vmatpush1.bf16.msra.mxu0 0
    %1230 = vmatprep.mubr.bf16.mxu0 0
    %1231 = vmatmul.mubr.bf16.gmra.mrb[0].mxu0 %v1196
    %v1232 = vpop.f32.mrb[0].mxu0
    %v1233 = vadd.f32 0.0, %v1232
    %v1234 = vpop.f32.mrb[0].mxu0
    %v1235 = vpop.f32.mrb[0].mxu0
    %v1236 = vpop.f32.mrb[0].mxu0
    %1237 = vdwg.mxu0
    %v1239 = vsel %vm288, %v621, 0
    %v1242 = vsel %vm288, %v971, 0
    %1244 = vmatprep.subr.bf16.mxu0 0
    %1245 = vmatpush1.bf16.xpose.msra.mxu0 %v1242
    %1246 = vmatprep.subr.bf16.mxu0 0
    %1247 = vmatpush1.bf16.xpose.msra.mxu0 0
    %1248 = vmatprep.subr.bf16.mxu0 0
    %1249 = vmatpush1.bf16.xpose.msra.mxu0 0
    %1250 = vmatprep.subr.bf16.mxu0 0
    %1251 = vmatpush1.bf16.xpose.msra.mxu0 0
    %1252 = vmatprep.subr.bf16.mxu0 0
    %1253 = vmatpush1.bf16.xpose.msra.mxu0 0
    %1254 = vmatprep.subr.bf16.mxu0 0
    %1255 = vmatpush1.bf16.xpose.msra.mxu0 0
    %1256 = vmatprep.subr.bf16.mxu0 0
    %1257 = vmatpush1.bf16.xpose.msra.mxu0 0
    %1258 = vmatprep.subr.bf16.mxu0 0
    %1259 = vmatpush1.bf16.xpose.msra.mxu0 0
    %1260 = vmatprep.subr.bf16.mxu0 0
    %1261 = vmatpush1.bf16.xpose.msra.mxu0 0
    %1262 = vmatprep.subr.bf16.mxu0 0
    %1263 = vmatpush1.bf16.xpose.msra.mxu0 0
    %1264 = vmatprep.subr.bf16.mxu0 0
    %1265 = vmatpush1.bf16.xpose.msra.mxu0 0
    %1266 = vmatprep.subr.bf16.mxu0 0
    %1267 = vmatpush1.bf16.xpose.msra.mxu0 0
    %1268 = vmatprep.subr.bf16.mxu0 0
    %1269 = vmatpush1.bf16.xpose.msra.mxu0 0
    %1270 = vmatprep.subr.bf16.mxu0 0
    %1271 = vmatpush1.bf16.xpose.msra.mxu0 0
    %1272 = vmatprep.subr.bf16.mxu0 0
    %1273 = vmatpush1.bf16.xpose.msra.mxu0 0
    %1274 = vmatprep.subr.bf16.mxu0 0
    %1275 = vmatpush1.bf16.xpose.msra.mxu0 0
    %1276 = vmatprep.mubr.bf16.mxu0 0
    %1277 = vmatmul.mubr.bf16.gmra.mrb[0].mxu0 %v1239
    %v1278 = vpop.f32.mrb[0].mxu0
    %v1279 = vadd.f32 0.0, %v1278
    %v1280 = vpop.f32.mrb[0].mxu0
    %v1281 = vpop.f32.mrb[0].mxu0
    %v1282 = vpop.f32.mrb[0].mxu0
    %1283 = vdwg.mxu0
    %v1285 = vrot.slane %v621, 4
    %v1287 = vrot.slane %v971, 4
    %v1289 = vsel %vm288, %v1285, 0
    %v1292 = vsel %vm288, %v1287, 0
    %1294 = vmatprep.subr.bf16.mxu0 0
    %1295 = vmatpush1.bf16.xpose.msra.mxu0 %v1292
    %1296 = vmatprep.subr.bf16.mxu0 0
    %1297 = vmatpush1.bf16.xpose.msra.mxu0 0
    %1298 = vmatprep.subr.bf16.mxu0 0
    %1299 = vmatpush1.bf16.xpose.msra.mxu0 0
    %1300 = vmatprep.subr.bf16.mxu0 0
    %1301 = vmatpush1.bf16.xpose.msra.mxu0 0
    %1302 = vmatprep.subr.bf16.mxu0 0
    %1303 = vmatpush1.bf16.xpose.msra.mxu0 0
    %1304 = vmatprep.subr.bf16.mxu0 0
    %1305 = vmatpush1.bf16.xpose.msra.mxu0 0
    %1306 = vmatprep.subr.bf16.mxu0 0
    %1307 = vmatpush1.bf16.xpose.msra.mxu0 0
    %1308 = vmatprep.subr.bf16.mxu0 0
    %1309 = vmatpush1.bf16.xpose.msra.mxu0 0
    %1310 = vmatprep.subr.bf16.mxu0 0
    %1311 = vmatpush1.bf16.xpose.msra.mxu0 0
    %1312 = vmatprep.subr.bf16.mxu0 0
    %1313 = vmatpush1.bf16.xpose.msra.mxu0 0
    %1314 = vmatprep.subr.bf16.mxu0 0
    %1315 = vmatpush1.bf16.xpose.msra.mxu0 0
    %1316 = vmatprep.subr.bf16.mxu0 0
    %1317 = vmatpush1.bf16.xpose.msra.mxu0 0
    %1318 = vmatprep.subr.bf16.mxu0 0
    %1319 = vmatpush1.bf16.xpose.msra.mxu0 0
    %1320 = vmatprep.subr.bf16.mxu0 0
    %1321 = vmatpush1.bf16.xpose.msra.mxu0 0
    %1322 = vmatprep.subr.bf16.mxu0 0
    %1323 = vmatpush1.bf16.xpose.msra.mxu0 0
    %1324 = vmatprep.subr.bf16.mxu0 0
    %1325 = vmatpush1.bf16.xpose.msra.mxu0 0
    %1326 = vmatprep.mubr.bf16.mxu0 0
    %1327 = vmatmul.mubr.bf16.gmra.mrb[0].mxu0 %v1289
    %v1328 = vpop.f32.mrb[0].mxu0
    %v1329 = vadd.f32 0.0, %v1328
    %v1330 = vpop.f32.mrb[0].mxu0
    %v1331 = vpop.f32.mrb[0].mxu0
    %v1332 = vpop.f32.mrb[0].mxu0
    %1333 = vdwg.mxu0
    %v1335 = vsel %vm288, %v622, 0
    %v1338 = vsel %vm288, %v972, 0
    %1340 = vmatprep.subr.bf16.mxu0 0
    %1341 = vmatpush1.bf16.xpose.msra.mxu0 %v1338
    %1342 = vmatprep.subr.bf16.mxu0 0
    %1343 = vmatpush1.bf16.xpose.msra.mxu0 0
    %1344 = vmatprep.subr.bf16.mxu0 0
    %1345 = vmatpush1.bf16.xpose.msra.mxu0 0
    %1346 = vmatprep.subr.bf16.mxu0 0
    %1347 = vmatpush1.bf16.xpose.msra.mxu0 0
    %1348 = vmatprep.subr.bf16.mxu0 0
    %1349 = vmatpush1.bf16.xpose.msra.mxu0 0
    %1350 = vmatprep.subr.bf16.mxu0 0
    %1351 = vmatpush1.bf16.xpose.msra.mxu0 0
    %1352 = vmatprep.subr.bf16.mxu0 0
    %1353 = vmatpush1.bf16.xpose.msra.mxu0 0
    %1354 = vmatprep.subr.bf16.mxu0 0
    %1355 = vmatpush1.bf16.xpose.msra.mxu0 0
    %1356 = vmatprep.subr.bf16.mxu0 0
    %1357 = vmatpush1.bf16.xpose.msra.mxu0 0
    %1358 = vmatprep.subr.bf16.mxu0 0
    %1359 = vmatpush1.bf16.xpose.msra.mxu0 0
    %1360 = vmatprep.subr.bf16.mxu0 0
    %1361 = vmatpush1.bf16.xpose.msra.mxu0 0
    %1362 = vmatprep.subr.bf16.mxu0 0
    %1363 = vmatpush1.bf16.xpose.msra.mxu0 0
    %1364 = vmatprep.subr.bf16.mxu0 0
    %1365 = vmatpush1.bf16.xpose.msra.mxu0 0
    %1366 = vmatprep.subr.bf16.mxu0 0
    %1367 = vmatpush1.bf16.xpose.msra.mxu0 0
    %1368 = vmatprep.subr.bf16.mxu0 0
    %1369 = vmatpush1.bf16.xpose.msra.mxu0 0
    %1370 = vmatprep.subr.bf16.mxu0 0
    %1371 = vmatpush1.bf16.xpose.msra.mxu0 0
    %1372 = vmatprep.mubr.bf16.mxu0 0
    %1373 = vmatmul.mubr.bf16.gmra.mrb[0].mxu0 %v1335
    %v1374 = vpop.f32.mrb[0].mxu0
    %v1375 = vadd.f32 0.0, %v1374
    %v1376 = vpop.f32.mrb[0].mxu0
    %v1377 = vpop.f32.mrb[0].mxu0
    %v1378 = vpop.f32.mrb[0].mxu0
    %1379 = vdwg.mxu0
    %v1381 = vrot.slane %v622, 4
    %v1383 = vrot.slane %v972, 4
    %v1385 = vsel %vm288, %v1381, 0
    %v1388 = vsel %vm288, %v1383, 0
    %1390 = vmatprep.subr.bf16.mxu0 0
    %1391 = vmatpush1.bf16.xpose.msra.mxu0 %v1388
    %1392 = vmatprep.subr.bf16.mxu0 0
    %1393 = vmatpush1.bf16.xpose.msra.mxu0 0
    %1394 = vmatprep.subr.bf16.mxu0 0
    %1395 = vmatpush1.bf16.xpose.msra.mxu0 0
    %1396 = vmatprep.subr.bf16.mxu0 0
    %1397 = vmatpush1.bf16.xpose.msra.mxu0 0
    %1398 = vmatprep.subr.bf16.mxu0 0
    %1399 = vmatpush1.bf16.xpose.msra.mxu0 0
    %1400 = vmatprep.subr.bf16.mxu0 0
    %1401 = vmatpush1.bf16.xpose.msra.mxu0 0
    %1402 = vmatprep.subr.bf16.mxu0 0
    %1403 = vmatpush1.bf16.xpose.msra.mxu0 0
    %1404 = vmatprep.subr.bf16.mxu0 0
    %1405 = vmatpush1.bf16.xpose.msra.mxu0 0
    %1406 = vmatprep.subr.bf16.mxu0 0
    %1407 = vmatpush1.bf16.xpose.msra.mxu0 0
    %1408 = vmatprep.subr.bf16.mxu0 0
    %1409 = vmatpush1.bf16.xpose.msra.mxu0 0
    %1410 = vmatprep.subr.bf16.mxu0 0
    %1411 = vmatpush1.bf16.xpose.msra.mxu0 0
    %1412 = vmatprep.subr.bf16.mxu0 0
    %1413 = vmatpush1.bf16.xpose.msra.mxu0 0
    %1414 = vmatprep.subr.bf16.mxu0 0
    %1415 = vmatpush1.bf16.xpose.msra.mxu0 0
    %1416 = vmatprep.subr.bf16.mxu0 0
    %1417 = vmatpush1.bf16.xpose.msra.mxu0 0
    %1418 = vmatprep.subr.bf16.mxu0 0
    %1419 = vmatpush1.bf16.xpose.msra.mxu0 0
    %1420 = vmatprep.subr.bf16.mxu0 0
    %1421 = vmatpush1.bf16.xpose.msra.mxu0 0
    %1422 = vmatprep.mubr.bf16.mxu0 0
    %1423 = vmatmul.mubr.bf16.gmra.mrb[0].mxu0 %v1385
    %v1424 = vpop.f32.mrb[0].mxu0
    %v1425 = vadd.f32 0.0, %v1424
    %v1426 = vpop.f32.mrb[0].mxu0
    %v1427 = vpop.f32.mrb[0].mxu0
    %v1428 = vpop.f32.mrb[0].mxu0
    %1429 = vdwg.mxu0
    %v1430 = vpack.c.bf16 %v1329, %v1279
    %v1431 = vpack.c.bf16 %v1425, %v1375
    %1432 = vxpose.xlu0.c.b16.start [1/8] %v1430, 128
    %1433 = vxpose.xlu0.c.b16.cont [2/8] %v1431, 128
    %1434 = vxpose.xlu0.c.b16.cont [3/8] 0, 128
    %1435 = vxpose.xlu0.c.b16.cont [4/8] 0, 128
    %1436 = vxpose.xlu0.c.b16.cont [5/8] 0, 128
    %1437 = vxpose.xlu0.c.b16.cont [6/8] 0, 128
    %1438 = vxpose.xlu0.c.b16.cont [7/8] 0, 128
    %1439 = vxpose.xlu0.c.b16.end [8/8] 0, 128
    %v1440 = vpop.trf.xlu0
    %v1441 = vpop.trf.xlu0
    %v1442 = vpop.trf.xlu0
    %v1443 = vpop.trf.xlu0
    %v1444 = vpop.trf.xlu0
    %v1445 = vpop.trf.xlu0
    %v1446 = vpop.trf.xlu0
    %v1447 = vpop.trf.xlu0
    %v1449 = vsel %vm163, %v1440, 0
    %1451 = vmatprep.subr.bf16.mxu0 0
    %1452 = vmatpush1.bf16.msra.mxu0 %v1191
    %1453 = vmatprep.subr.bf16.mxu0 0
    %1454 = vmatpush1.bf16.msra.mxu0 %v1192
    %1455 = vmatprep.subr.bf16.mxu0 0
    %1456 = vmatpush1.bf16.msra.mxu0 0
    %1457 = vmatprep.subr.bf16.mxu0 0
    %1458 = vmatpush1.bf16.msra.mxu0 0
    %1459 = vmatprep.subr.bf16.mxu0 0
    %1460 = vmatpush1.bf16.msra.mxu0 0
    %1461 = vmatprep.subr.bf16.mxu0 0
    %1462 = vmatpush1.bf16.msra.mxu0 0
    %1463 = vmatprep.subr.bf16.mxu0 0
    %1464 = vmatpush1.bf16.msra.mxu0 0
    %1465 = vmatprep.subr.bf16.mxu0 0
    %1466 = vmatpush1.bf16.msra.mxu0 0
    %1467 = vmatprep.subr.bf16.mxu0 0
    %1468 = vmatpush1.bf16.msra.mxu0 0
    %1469 = vmatprep.subr.bf16.mxu0 0
    %1470 = vmatpush1.bf16.msra.mxu0 0
    %1471 = vmatprep.subr.bf16.mxu0 0
    %1472 = vmatpush1.bf16.msra.mxu0 0
    %1473 = vmatprep.subr.bf16.mxu0 0
    %1474 = vmatpush1.bf16.msra.mxu0 0
    %1475 = vmatprep.subr.bf16.mxu0 0
    %1476 = vmatpush1.bf16.msra.mxu0 0
    %1477 = vmatprep.subr.bf16.mxu0 0
    %1478 = vmatpush1.bf16.msra.mxu0 0
    %1479 = vmatprep.subr.bf16.mxu0 0
    %1480 = vmatpush1.bf16.msra.mxu0 0
    %1481 = vmatprep.subr.bf16.mxu0 0
    %1482 = vmatpush1.bf16.msra.mxu0 0
    %1483 = vmatprep.mubr.bf16.mxu0 0
    %1484 = vmatmul.mubr.bf16.gmra.mrb[0].mxu0 %v1449
    %v1485 = vpop.f32.mrb[0].mxu0
    %v1486 = vadd.f32 0.0, %v1485
    %v1487 = vpop.f32.mrb[0].mxu0
    %v1488 = vpop.f32.mrb[0].mxu0
    %v1489 = vpop.f32.mrb[0].mxu0
    %1490 = vdwg.mxu0
    %1491 = vst.msk [vmem:[#allocation10] sm:$0xff] %vm163, %v1233
    %1492 = vst.msk [vmem:[#allocation10 + $0x8] sm:$0xff] %vm163, %v1486
    // Predicated region
    $region34: #{tpu_custom_call.1} parent=1 // pred_check
      _
    $region35: #{tpu_custom_call.1} parent=1 // pred_check_branch
      %1494 = sbr.rel (0) target = $region37
    $region36: #{tpu_custom_call.1} parent=1 // pred_region
      %s1496 = ssub.s32 256, 256
      %1497 = vsyncadd [#allocation4], %s1496
      %s1498 = sshll.u32 [#allocation10], 4
      %s1499 = int_to_ptr.vmem [resolvable:$true] %s1498
      %1504 = dma.vmem_to_hbm [thread:$0]  %s1499, 256, %s4, [#allocation4], 128, 128, 8
    $region37: #{tpu_custom_call.1} parent=1 // pred_fallthru
      _
    // Predicated region
    $region38: #{tpu_custom_call.1} parent=1 // pred_check
      _
    $region39: #{tpu_custom_call.1} parent=1 // pred_check_branch
      %1506 = sbr.rel (0) target = $region41
    $region40: #{tpu_custom_call.1} parent=1 // pred_region
      %1507 = dma.done [#allocation4], 256
    $region41: #{tpu_custom_call.1} parent=1 // pred_fallthru
      _
    %1508 = vsyncpa [#allocation3], 1
    %1509 = vsyncpa [#allocation6], 1
    %1510 = vsyncpa [#allocation9], 1
    %1511 = vsyncpa [#allocation4], 1

</llo_original>
